<compile_context>
chip_gen: v6e
topology: v6e:2x2x1
jax: 0.10.0
libtpu: 0.0.40
codegen_flags: <defaults>
</compile_context>

<pallas_src>
import jax
import jax.numpy as jnp
from jax.experimental import pallas as pl
from jax.experimental.pallas import tpu as pltpu


def _round_up(x: int, m: int) -> int:
    return (x + m - 1) // m * m


def _make_dcnv2_kernel(n_cross: int, n_deep: int):
    """Build a kernel body for the given layer counts (refs passed flat)."""

    def kernel(*refs):
        idx = 0
        x_ref = refs[idx]; idx += 1
        cross_w = [refs[idx + 2 * i] for i in range(n_cross)]
        cross_b = [refs[idx + 2 * i + 1] for i in range(n_cross)]
        idx += 2 * n_cross
        deep_w = [refs[idx + 2 * i] for i in range(n_deep)]
        deep_b = [refs[idx + 2 * i + 1] for i in range(n_deep)]
        idx += 2 * n_deep
        head_w = refs[idx]; head_b = refs[idx + 1]; idx += 2
        o_ref = refs[idx]

        bf16 = jnp.bfloat16

        # x0 kept in f32; all element-wise math stays f32 (v5e VPU has no bf16).
        x0 = x_ref[...].astype(jnp.float32)
        x = x0

        # Cross layers: x = x0 * (x @ W_c + b_c)   (bf16 MXU inputs, f32 accum)
        for i in range(n_cross):
            cx = jnp.dot(x.astype(bf16), cross_w[i][...],
                         preferred_element_type=jnp.float32)
            cx = cx + cross_b[i][...]
            x = x0 * cx

        # Deep MLP: Linear -> ReLU (-> Dropout == identity at inference)
        for i in range(n_deep):
            x = jnp.dot(x.astype(bf16), deep_w[i][...],
                        preferred_element_type=jnp.float32) + deep_b[i][...]
            x = jnp.maximum(x, 0.0)

        # Head (output lanes are 128-padded -> unmasked full-lane stores).
        out = jnp.dot(x.astype(bf16), head_w[...],
                      preferred_element_type=jnp.float32) + head_b[...]
        o_ref[...] = out.astype(o_ref.dtype)

    return kernel


def dcnv2_forward(x, params, *, batch_tile: int = 128):
    """Run the fused DCNv2 forward Pallas kernel.

    x:      [B, d_in] float32
    params: dict with keys (weights stored pre-transposed as [fan_in, fan_out])
        'cross_w': list of [d_in, d_in],   'cross_b': list of [1, d_in]
        'deep_w' : list of [d_prev, d_deep], 'deep_b': list of [1, d_deep]
        'head_w' : [d_deep, d_out],        'head_b': [1, d_out]
    """
    B, d_in = x.shape
    n_cross = len(params["cross_w"])
    n_deep = len(params["deep_w"])
    d_deep = params["deep_w"][0].shape[1] if n_deep else d_in
    d_out = params["head_w"].shape[1]

    # Lane-dense padded dims.
    d_in_p = _round_up(d_in, 128)
    d_deep_p = _round_up(d_deep, 128)
    d_out_p = _round_up(d_out, 128)

    # Batch tile: multiple of 8 sublanes, no bigger than the (padded) batch.
    tb = max(8, min(_round_up(batch_tile, 8), _round_up(B, 8)))
    B_p = _round_up(B, tb)
    n_steps = B_p // tb

    # Zero-pad activations (f32) and weights (cast to bf16) / biases (f32).
    x_p = jnp.pad(x.astype(jnp.float32),
                  ((0, B_p - B), (0, d_in_p - d_in)))

    def pad_w(w, rows, cols):
        w = jnp.pad(w, ((0, rows - w.shape[0]), (0, cols - w.shape[1])))
        return w.astype(jnp.bfloat16)

    def pad_b(b, cols):
        b = jnp.pad(b, ((0, 0), (0, cols - b.shape[1])))
        return b.astype(jnp.float32)

    operands = [x_p]
    in_specs = [pl.BlockSpec((tb, d_in_p), lambda i: (i, 0))]

    def resident_spec(arr):
        # Constant block index across the whole grid -> single-buffer it.
        return pl.BlockSpec(arr.shape, lambda i: (0,) * arr.ndim,
                            pipeline_mode=pl.Buffered(1))

    for i in range(n_cross):
        w = pad_w(params["cross_w"][i], d_in_p, d_in_p)
        b = pad_b(params["cross_b"][i], d_in_p)
        operands += [w, b]
        in_specs += [resident_spec(w), resident_spec(b)]
    for i in range(n_deep):
        rows = d_in_p if i == 0 else d_deep_p
        w = pad_w(params["deep_w"][i], rows, d_deep_p)
        b = pad_b(params["deep_b"][i], d_deep_p)
        operands += [w, b]
        in_specs += [resident_spec(w), resident_spec(b)]
    head_w = pad_w(params["head_w"], d_deep_p if n_deep else d_in_p, d_out_p)
    head_b = pad_b(params["head_b"], d_out_p)
    operands += [head_w, head_b]
    in_specs += [resident_spec(head_w), resident_spec(head_b)]

    # Explicit VMEM budget: resident weights (allow 2x for safety) +
    # double-buffered activation tiles + headroom; capped for v7x (64 MiB).
    weight_bytes = sum(int(a.size) * a.dtype.itemsize for a in operands[1:])
    tile_bytes = tb * d_in_p * 4 + tb * d_out_p * 4
    vmem_limit = 2 * weight_bytes + 4 * tile_bytes + (4 << 20)
    vmem_limit = max(16 << 20, min(vmem_limit, 64 << 20))

    # Advisory cost estimate for the XLA scheduler.
    flops_per_row = 2 * (n_cross * d_in_p * d_in_p
                         + (d_in_p * d_deep_p if n_deep else 0)
                         + max(0, n_deep - 1) * d_deep_p * d_deep_p
                         + (d_deep_p if n_deep else d_in_p) * d_out_p)
    cost = pl.CostEstimate(
        flops=B_p * flops_per_row,
        transcendentals=0,
        bytes_accessed=int(x_p.size) * 4 + weight_bytes + B_p * d_out_p * 4,
    )

    kernel = _make_dcnv2_kernel(n_cross, n_deep)

    out_p = pl.pallas_call(
        kernel,
        out_shape=jax.ShapeDtypeStruct((B_p, d_out_p), jnp.float32),
        grid_spec=pltpu.PrefetchScalarGridSpec(
            num_scalar_prefetch=0,
            grid=(n_steps,),
            in_specs=in_specs,
            out_specs=pl.BlockSpec((tb, d_out_p), lambda i: (i, 0)),
        ),
        compiler_params=pltpu.CompilerParams(
            dimension_semantics=("parallel",),
            vmem_limit_bytes=int(vmem_limit),
        ),
        cost_estimate=cost,
    )(*operands)

    return out_p[:B, :d_out]


def init_params(key, d_in, d_deep, d_out, n_cross, n_deep):
    """Deterministic Linear-style init: W ~ U(-1/sqrt(fan_in), 1/sqrt(fan_in)).

    Weights stored as [fan_in, fan_out] (pre-transposed vs PyTorch Linear).
    Cross-layer biases are zero-initialized (as in the module's __init__).
    """
    params = {"cross_w": [], "cross_b": [], "deep_w": [], "deep_b": []}

    def linear(key, fan_in, fan_out, zero_bias=False):
        kw, kb = jax.random.split(key)
        bound = 1.0 / (fan_in ** 0.5)
        w = jax.random.uniform(kw, (fan_in, fan_out), jnp.float32, -bound, bound)
        if zero_bias:
            b = jnp.zeros((1, fan_out), jnp.float32)
        else:
            b = jax.random.uniform(kb, (1, fan_out), jnp.float32, -bound, bound)
        return w, b

    keys = jax.random.split(key, n_cross + n_deep + 1)
    k_idx = 0
    for _ in range(n_cross):
        w, b = linear(keys[k_idx], d_in, d_in, zero_bias=True)
        params["cross_w"].append(w)
        params["cross_b"].append(b)
        k_idx += 1
    for i in range(n_deep):
        fan_in = d_in if i == 0 else d_deep
        w, b = linear(keys[k_idx], fan_in, d_deep)
        params["deep_w"].append(w)
        params["deep_b"].append(b)
        k_idx += 1
    params["head_w"], params["head_b"] = linear(keys[k_idx], d_deep, d_out)
    return params


def dcnv2_reference_f32(x, params):
    """Pure-JAX full-f32 reference mirroring the PyTorch forward (eval mode)."""
    x0 = x
    xx = x
    for w, b in zip(params["cross_w"], params["cross_b"]):
        xx = x0 * (xx @ w + b)
    for w, b in zip(params["deep_w"], params["deep_b"]):
        xx = jnp.maximum(xx @ w + b, 0.0)
    return xx @ params["head_w"] + params["head_b"]


def dcnv2_reference_bf16(x, params):
    """Reference mirroring the kernel arithmetic (bf16 MXU inputs, f32 accum)."""
    bf16 = jnp.bfloat16
    x0 = x.astype(jnp.float32)
    xx = x0
    for w, b in zip(params["cross_w"], params["cross_b"]):
        cx = jnp.dot(xx.astype(bf16), w.astype(bf16),
                     preferred_element_type=jnp.float32) + b
        xx = x0 * cx
    for w, b in zip(params["deep_w"], params["deep_b"]):
        xx = jnp.dot(xx.astype(bf16), w.astype(bf16),
                     preferred_element_type=jnp.float32) + b
        xx = jnp.maximum(xx, 0.0)
    return jnp.dot(xx.astype(bf16), params["head_w"].astype(bf16),
                   preferred_element_type=jnp.float32) + params["head_b"]


if __name__ == "__main__":
    # Module config: d_in=32, d_deep=64, d_out=8, n_cross_layers=2,
    # n_deep_layers=2, dropout_p=0.0 (inference). Batch 512 with 128-row tiles
    # -> 4 grid steps (pipelining + megacore sharding exercised).
    B, D_IN, D_DEEP, D_OUT = 512, 32, 64, 8
    N_CROSS, N_DEEP = 2, 2

    key = jax.random.PRNGKey(0)
    k_x, k_p = jax.random.split(key)
    x = jax.random.normal(k_x, (B, D_IN), dtype=jnp.float32)
    params = init_params(k_p, D_IN, D_DEEP, D_OUT, N_CROSS, N_DEEP)

    out = dcnv2_forward(x, params, batch_tile=128)
    out = jax.block_until_ready(out)

    assert out.shape == (B, D_OUT)

    # Tight check against a reference that mirrors the kernel's bf16/f32 split.
    ref_bf16 = dcnv2_reference_bf16(x, params)
    assert jnp.allclose(out, ref_bf16, atol=1e-2, rtol=1e-2), \
        "mismatch vs bf16-mirrored reference"

    # Loose check against the full-f32 reference (bf16 rounding tolerance).
    ref_f32 = dcnv2_reference_f32(x, params)
    assert jnp.allclose(out, ref_f32, atol=1e-1, rtol=1e-1), \
        "mismatch vs f32 reference"

    print("KERNEL_OK")
</pallas_src>

<mosaic_0001>
module attributes {stable_mosaic.version = 11 : i64} {
  func.func @kernel(%arg0: i32, %arg1: memref<128x128xf32, #tpu.memory_space<vmem>>, %arg2: memref<128x128xbf16, #tpu.memory_space<vmem>>, %arg3: memref<1x128xf32, #tpu.memory_space<vmem>>, %arg4: memref<128x128xbf16, #tpu.memory_space<vmem>>, %arg5: memref<1x128xf32, #tpu.memory_space<vmem>>, %arg6: memref<128x128xbf16, #tpu.memory_space<vmem>>, %arg7: memref<1x128xf32, #tpu.memory_space<vmem>>, %arg8: memref<128x128xbf16, #tpu.memory_space<vmem>>, %arg9: memref<1x128xf32, #tpu.memory_space<vmem>>, %arg10: memref<128x128xbf16, #tpu.memory_space<vmem>>, %arg11: memref<1x128xf32, #tpu.memory_space<vmem>>, %arg12: memref<128x128xf32, #tpu.memory_space<vmem>>) attributes {dimension_semantics = [#tpu.dimension_semantics<parallel>], iteration_bounds = array<i64: 4>, scalar_prefetch = 0 : i64, scratch_operands = 0 : i64, tpu.core_type = #tpu.core_type<tc>, window_params = [{transform_indices = @transform_0, window_bounds = array<i64: 128, 128>}, {pipeline_mode = #tpu.pipeline_mode<synchronous>, transform_indices = @transform_1, window_bounds = array<i64: 128, 128>}, {pipeline_mode = #tpu.pipeline_mode<synchronous>, transform_indices = @transform_2, window_bounds = array<i64: 1, 128>}, {pipeline_mode = #tpu.pipeline_mode<synchronous>, transform_indices = @transform_3, window_bounds = array<i64: 128, 128>}, {pipeline_mode = #tpu.pipeline_mode<synchronous>, transform_indices = @transform_4, window_bounds = array<i64: 1, 128>}, {pipeline_mode = #tpu.pipeline_mode<synchronous>, transform_indices = @transform_5, window_bounds = array<i64: 128, 128>}, {pipeline_mode = #tpu.pipeline_mode<synchronous>, transform_indices = @transform_6, window_bounds = array<i64: 1, 128>}, {pipeline_mode = #tpu.pipeline_mode<synchronous>, transform_indices = @transform_7, window_bounds = array<i64: 128, 128>}, {pipeline_mode = #tpu.pipeline_mode<synchronous>, transform_indices = @transform_8, window_bounds = array<i64: 1, 128>}, {pipeline_mode = #tpu.pipeline_mode<synchronous>, transform_indices = @transform_9, window_bounds = array<i64: 128, 128>}, {pipeline_mode = #tpu.pipeline_mode<synchronous>, transform_indices = @transform_10, window_bounds = array<i64: 1, 128>}, {transform_indices = @transform_11, window_bounds = array<i64: 128, 128>}]} {
    %c0 = arith.constant 0 : index
    %c0_0 = arith.constant 0 : index
    %0 = vector.load %arg1[%c0, %c0_0] : memref<128x128xf32, #tpu.memory_space<vmem>>, vector<128x128xf32>
    %1 = arith.truncf %0 : vector<128x128xf32> to vector<128x128xbf16>
    %c0_1 = arith.constant 0 : index
    %c0_2 = arith.constant 0 : index
    %2 = vector.load %arg2[%c0_1, %c0_2] : memref<128x128xbf16, #tpu.memory_space<vmem>>, vector<128x128xbf16>
    %cst = arith.constant dense<0.000000e+00> : vector<128x128xf32>
    %3 = tpu.matmul %1, %2, %cst {dimension_numbers = #tpu.dot_dimension_numbers<[1], [0], [0], [1], [0, 0, 1, 1], [], []>} : vector<128x128xbf16>, vector<128x128xbf16>, vector<128x128xf32> -> vector<128x128xf32>
    %c0_3 = arith.constant 0 : index
    %c0_4 = arith.constant 0 : index
    %4 = vector.load %arg3[%c0_3, %c0_4] : memref<1x128xf32, #tpu.memory_space<vmem>>, vector<1x128xf32>
    %5 = vector.broadcast %4 : vector<1x128xf32> to vector<128x128xf32>
    %6 = arith.addf %3, %5 : vector<128x128xf32>
    %7 = arith.mulf %0, %6 : vector<128x128xf32>
    %8 = arith.truncf %7 : vector<128x128xf32> to vector<128x128xbf16>
    %c0_5 = arith.constant 0 : index
    %c0_6 = arith.constant 0 : index
    %9 = vector.load %arg4[%c0_5, %c0_6] : memref<128x128xbf16, #tpu.memory_space<vmem>>, vector<128x128xbf16>
    %cst_7 = arith.constant dense<0.000000e+00> : vector<128x128xf32>
    %10 = tpu.matmul %8, %9, %cst_7 {dimension_numbers = #tpu.dot_dimension_numbers<[1], [0], [0], [1], [0, 0, 1, 1], [], []>} : vector<128x128xbf16>, vector<128x128xbf16>, vector<128x128xf32> -> vector<128x128xf32>
    %c0_8 = arith.constant 0 : index
    %c0_9 = arith.constant 0 : index
    %11 = vector.load %arg5[%c0_8, %c0_9] : memref<1x128xf32, #tpu.memory_space<vmem>>, vector<1x128xf32>
    %12 = vector.broadcast %11 : vector<1x128xf32> to vector<128x128xf32>
    %13 = arith.addf %10, %12 : vector<128x128xf32>
    %14 = arith.mulf %0, %13 : vector<128x128xf32>
    %15 = arith.truncf %14 : vector<128x128xf32> to vector<128x128xbf16>
    %c0_10 = arith.constant 0 : index
    %c0_11 = arith.constant 0 : index
    %16 = vector.load %arg6[%c0_10, %c0_11] : memref<128x128xbf16, #tpu.memory_space<vmem>>, vector<128x128xbf16>
    %cst_12 = arith.constant dense<0.000000e+00> : vector<128x128xf32>
    %17 = tpu.matmul %15, %16, %cst_12 {dimension_numbers = #tpu.dot_dimension_numbers<[1], [0], [0], [1], [0, 0, 1, 1], [], []>} : vector<128x128xbf16>, vector<128x128xbf16>, vector<128x128xf32> -> vector<128x128xf32>
    %c0_13 = arith.constant 0 : index
    %c0_14 = arith.constant 0 : index
    %18 = vector.load %arg7[%c0_13, %c0_14] : memref<1x128xf32, #tpu.memory_space<vmem>>, vector<1x128xf32>
    %19 = vector.broadcast %18 : vector<1x128xf32> to vector<128x128xf32>
    %20 = arith.addf %17, %19 : vector<128x128xf32>
    %cst_15 = arith.constant 0.000000e+00 : f32
    %21 = vector.broadcast %cst_15 : f32 to vector<128x128xf32>
    %22 = arith.maximumf %20, %21 : vector<128x128xf32>
    %23 = arith.truncf %22 : vector<128x128xf32> to vector<128x128xbf16>
    %c0_16 = arith.constant 0 : index
    %c0_17 = arith.constant 0 : index
    %24 = vector.load %arg8[%c0_16, %c0_17] : memref<128x128xbf16, #tpu.memory_space<vmem>>, vector<128x128xbf16>
    %cst_18 = arith.constant dense<0.000000e+00> : vector<128x128xf32>
    %25 = tpu.matmul %23, %24, %cst_18 {dimension_numbers = #tpu.dot_dimension_numbers<[1], [0], [0], [1], [0, 0, 1, 1], [], []>} : vector<128x128xbf16>, vector<128x128xbf16>, vector<128x128xf32> -> vector<128x128xf32>
    %c0_19 = arith.constant 0 : index
    %c0_20 = arith.constant 0 : index
    %26 = vector.load %arg9[%c0_19, %c0_20] : memref<1x128xf32, #tpu.memory_space<vmem>>, vector<1x128xf32>
    %27 = vector.broadcast %26 : vector<1x128xf32> to vector<128x128xf32>
    %28 = arith.addf %25, %27 : vector<128x128xf32>
    %cst_21 = arith.constant 0.000000e+00 : f32
    %29 = vector.broadcast %cst_21 : f32 to vector<128x128xf32>
    %30 = arith.maximumf %28, %29 : vector<128x128xf32>
    %31 = arith.truncf %30 : vector<128x128xf32> to vector<128x128xbf16>
    %c0_22 = arith.constant 0 : index
    %c0_23 = arith.constant 0 : index
    %32 = vector.load %arg10[%c0_22, %c0_23] : memref<128x128xbf16, #tpu.memory_space<vmem>>, vector<128x128xbf16>
    %cst_24 = arith.constant dense<0.000000e+00> : vector<128x128xf32>
    %33 = tpu.matmul %31, %32, %cst_24 {dimension_numbers = #tpu.dot_dimension_numbers<[1], [0], [0], [1], [0, 0, 1, 1], [], []>} : vector<128x128xbf16>, vector<128x128xbf16>, vector<128x128xf32> -> vector<128x128xf32>
    %c0_25 = arith.constant 0 : index
    %c0_26 = arith.constant 0 : index
    %34 = vector.load %arg11[%c0_25, %c0_26] : memref<1x128xf32, #tpu.memory_space<vmem>>, vector<1x128xf32>
    %35 = vector.broadcast %34 : vector<1x128xf32> to vector<128x128xf32>
    %36 = arith.addf %33, %35 : vector<128x128xf32>
    %c0_27 = arith.constant 0 : index
    %c0_28 = arith.constant 0 : index
    %37 = vector.load %arg12[%c0_27, %c0_28] : memref<128x128xf32, #tpu.memory_space<vmem>>, vector<128x128xf32>
    tpu.vector_store %arg12[%c0_27, %c0_28], %36 {strides = array<i32>} : memref<128x128xf32, #tpu.memory_space<vmem>>, vector<128x128xf32>,
    return
  }
  func.func @transform_0(%arg0: i32) -> (i32, i32) {
    %c0_i32 = arith.constant 0 : i32
    %c0_i32_0 = arith.constant 0 : i32
    return %arg0, %c0_i32 : i32, i32
  }
  func.func @transform_1(%arg0: i32) -> (i32, i32) {
    %c0_i32 = arith.constant 0 : i32
    %c0_i32_0 = arith.constant 0 : i32
    %c0_i32_1 = arith.constant 0 : i32
    return %c0_i32, %c0_i32_0 : i32, i32
  }
  func.func @transform_2(%arg0: i32) -> (i32, i32) {
    %c0_i32 = arith.constant 0 : i32
    %c0_i32_0 = arith.constant 0 : i32
    %c0_i32_1 = arith.constant 0 : i32
    return %c0_i32, %c0_i32_0 : i32, i32
  }
  func.func @transform_3(%arg0: i32) -> (i32, i32) {
    %c0_i32 = arith.constant 0 : i32
    %c0_i32_0 = arith.constant 0 : i32
    %c0_i32_1 = arith.constant 0 : i32
    return %c0_i32, %c0_i32_0 : i32, i32
  }
  func.func @transform_4(%arg0: i32) -> (i32, i32) {
    %c0_i32 = arith.constant 0 : i32
    %c0_i32_0 = arith.constant 0 : i32
    %c0_i32_1 = arith.constant 0 : i32
    return %c0_i32, %c0_i32_0 : i32, i32
  }
  func.func @transform_5(%arg0: i32) -> (i32, i32) {
    %c0_i32 = arith.constant 0 : i32
    %c0_i32_0 = arith.constant 0 : i32
    %c0_i32_1 = arith.constant 0 : i32
    return %c0_i32, %c0_i32_0 : i32, i32
  }
  func.func @transform_6(%arg0: i32) -> (i32, i32) {
    %c0_i32 = arith.constant 0 : i32
    %c0_i32_0 = arith.constant 0 : i32
    %c0_i32_1 = arith.constant 0 : i32
    return %c0_i32, %c0_i32_0 : i32, i32
  }
  func.func @transform_7(%arg0: i32) -> (i32, i32) {
    %c0_i32 = arith.constant 0 : i32
    %c0_i32_0 = arith.constant 0 : i32
    %c0_i32_1 = arith.constant 0 : i32
    return %c0_i32, %c0_i32_0 : i32, i32
  }
  func.func @transform_8(%arg0: i32) -> (i32, i32) {
    %c0_i32 = arith.constant 0 : i32
    %c0_i32_0 = arith.constant 0 : i32
    %c0_i32_1 = arith.constant 0 : i32
    return %c0_i32, %c0_i32_0 : i32, i32
  }
  func.func @transform_9(%arg0: i32) -> (i32, i32) {
    %c0_i32 = arith.constant 0 : i32
    %c0_i32_0 = arith.constant 0 : i32
    %c0_i32_1 = arith.constant 0 : i32
    return %c0_i32, %c0_i32_0 : i32, i32
  }
  func.func @transform_10(%arg0: i32) -> (i32, i32) {
    %c0_i32 = arith.constant 0 : i32
    %c0_i32_0 = arith.constant 0 : i32
    %c0_i32_1 = arith.constant 0 : i32
    return %c0_i32, %c0_i32_0 : i32, i32
  }
  func.func @transform_11(%arg0: i32) -> (i32, i32) {
    %c0_i32 = arith.constant 0 : i32
    %c0_i32_0 = arith.constant 0 : i32
    return %arg0, %c0_i32 : i32, i32
  }
}

</mosaic_0001>

<llo_original>
// kernel: tpu_custom_call.1
$region0: #{tpu_custom_call.1}
  #allocation0 [shape = 'u32[]', space=smem, size = 0x4, offset = 0x4, fixed_abs, tag = 'smem constant byte address 0x4 - core index']
  #allocation1 [shape = 'u32[144,128]{1,0:T(1,128)}', space=vmem, size = 0x12000, scoped, tag = 'internal scratch']
  %s0 = inlined_call_operand.hbm [shape: f32[512,128], index: 0, kind: input, shape index: {}]
  %s1 = inlined_call_operand.hbm [shape: bf16[128,128], index: 1, kind: input, shape index: {}]
  %s2 = inlined_call_operand.vmem [shape: f32[1,128], index: 2, kind: input, shape index: {}]
  %s3 = inlined_call_operand.hbm [shape: bf16[128,128], index: 3, kind: input, shape index: {}]
  %s4 = inlined_call_operand.vmem [shape: f32[1,128], index: 4, kind: input, shape index: {}]
  %s5 = inlined_call_operand.hbm [shape: bf16[128,128], index: 5, kind: input, shape index: {}]
  %s6 = inlined_call_operand.vmem [shape: f32[1,128], index: 6, kind: input, shape index: {}]
  %s7 = inlined_call_operand.hbm [shape: bf16[128,128], index: 7, kind: input, shape index: {}]
  %s8 = inlined_call_operand.vmem [shape: f32[1,128], index: 8, kind: input, shape index: {}]
  %s9 = inlined_call_operand.hbm [shape: bf16[128,128], index: 9, kind: input, shape index: {}]
  %s10 = inlined_call_operand.vmem [shape: f32[1,128], index: 10, kind: input, shape index: {}]
  %s11 = inlined_call_operand.hbm [shape: f32[512,128], index: 11, kind: output, shape index: {}]
  %s12 = sld [smem:[#allocation0]]
  $region101: #{tpu_custom_call.1} parent=0
    _
  %s14 = ssub.s32 1, %s12
  %s15 = scalar_select 0, %s14, %s12
  $region1: #{tpu_custom_call.1} parent=0
    #allocation2 [shape = 'u8[131072]{0}', space=vmem, size = 0x20000, scoped, tag = 'input window, operand 0']
    #allocation3 [shape = 's32[2]{0}', space=sflag, size = 0x8, scoped, tag = 'scoped memory for tpu_custom_call.1']
    #allocation4 [shape = 's32[2]{0}', space=sflag, size = 0x8, scoped, tag = 'scoped memory for tpu_custom_call.1']
    #allocation5 [shape = 'u8[32768]{0}', space=vmem, size = 0x8000, scoped, tag = 'input window, operand 1, single buffered']
    #allocation6 [shape = 's32[1]{0}', space=sflag, size = 0x4, scoped, tag = 'scoped memory for tpu_custom_call.1']
    #allocation7 [shape = 'u8[32768]{0}', space=vmem, size = 0x8000, scoped, tag = 'input window, operand 3, single buffered']
    #allocation8 [shape = 'u8[32768]{0}', space=vmem, size = 0x8000, scoped, tag = 'input window, operand 5, single buffered']
    #allocation9 [shape = 's32[1]{0}', space=sflag, size = 0x4, scoped, tag = 'scoped memory for tpu_custom_call.1']
    #allocation10 [shape = 'u8[32768]{0}', space=vmem, size = 0x8000, scoped, tag = 'input window, operand 7, single buffered']
    #allocation11 [shape = 'u8[32768]{0}', space=vmem, size = 0x8000, scoped, tag = 'input window, operand 9, single buffered']
    #allocation12 [shape = 's32[1]{0}', space=sflag, size = 0x4, scoped, tag = 'scoped memory for tpu_custom_call.1']
    #allocation13 [shape = 'u8[131072]{0}', space=vmem, size = 0x20000, scoped, tag = 'output window, operand 0']
    %16 = vsyncpa [#allocation3], 0
    %s17 = scalar_lea.sflag [#allocation3], 1
    %18 = vsyncpa %s17, 0
    %19 = vsyncpa [#allocation6], 0
    %20 = vsyncpa [#allocation9], 0
    %21 = vsyncpa [#allocation12], 0
    %22 = vsyncpa [#allocation4], 0
    %s23 = scalar_lea.sflag [#allocation4], 1
    %24 = vsyncpa %s23, 0
    loop: start=0, step=1, limit=6
    $region2: #{tpu_custom_call.1} parent=1 // loop_pre_header
      _
    $region3: #{tpu_custom_call.1} parent=1 // loop_header
      %s26 = sphi 0, %s30
      %p27 = scmp.ge.s32.totalorder %s26, 6
      %s36 = sphi 0, %s38
      %s39 = sphi 0, %s36
      %s40 = sphi 0, %s39
      %s56 = sphi 0, %s40
      %s60 = sphi 0, %s60
      %s62 = sphi 0, %s60
      %s63 = sphi 0, %s62
      %s77 = sphi 0, %s63
      %s81 = sphi 0, %s81
      %s83 = sphi 0, %s81
      %s84 = sphi 0, %s83
      %s98 = sphi 0, %s84
      %s102 = sphi 0, %s102
      %s104 = sphi 0, %s102
      %s105 = sphi 0, %s104
      %s119 = sphi 0, %s105
      %s123 = sphi 0, %s123
      %s125 = sphi 0, %s123
      %s126 = sphi 0, %s125
      %s140 = sphi 0, %s126
      %s144 = sphi 0, %s144
      %s146 = sphi 0, %s144
      %s147 = sphi 0, %s146
      %s161 = sphi 0, %s147
      %s165 = sphi 0, %s165
      %s167 = sphi 0, %s165
      %s168 = sphi 0, %s167
      %s182 = sphi 0, %s168
      %s186 = sphi 0, %s186
      %s188 = sphi 0, %s186
      %s189 = sphi 0, %s188
      %s203 = sphi 0, %s189
      %s207 = sphi 0, %s207
      %s209 = sphi 0, %s207
      %s210 = sphi 0, %s209
      %s224 = sphi 0, %s210
      %s228 = sphi 0, %s228
      %s230 = sphi 0, %s228
      %s231 = sphi 0, %s230
      %s245 = sphi 0, %s231
      %s249 = sphi 0, %s249
      %s251 = sphi 0, %s249
      %s252 = sphi 0, %s251
      %s266 = sphi 0, %s252
      %s272 = sphi 0, %s274
      %s275 = sphi 0, %s272
      %s276 = sphi 0, %s275
      %s292 = sphi 0, %s276
    $region4: #{tpu_custom_call.1} parent=1 // loop_header_branch
      %29 = sbr.rel (%p27) target = $region8
    $region5: #{tpu_custom_call.1} parent=1 // loop_body
      %s31 = ssub.s32 %s26, 1
      %s32 = ssub.s32 %s26, 2
      %s33 = sadd.s32 %s26, 1
      %s34 = ssub.s32 %s26, %s33
      %p35 = scmp.eq.s32.totalorder %s34, 0
      %s37 = sadd.s32 %s36, 1
      %s38 = scalar_select %p35, %s36, %s37
      %p41 = pneg %p35
      %p42 = scmp.eq.s32.totalorder %s26, 3
      %p43 = por %p41, %p42
      %p44 = scmp.ne.s32.totalorder %s36, %s39
      %p45 = scmp.eq.s32.totalorder %s26, 0
      %p46 = por %p44, %p45
      %p47 = scmp.ne.s32.totalorder %s36, %s39
      %p48 = scmp.eq.s32.totalorder %s31, 3
      %p49 = por %p47, %p48
      %p50 = scmp.ne.s32.totalorder %s39, %s40
      %p51 = scmp.eq.s32.totalorder %s31, 0
      %p52 = por %p50, %p51
      %p53 = scmp.ne.s32.totalorder %s39, %s40
      %p54 = scmp.eq.s32.totalorder %s32, 3
      %p55 = por %p53, %p54
      %p57 = scmp.ne.s32.totalorder %s40, %s56
      %p58 = scmp.eq.s32.totalorder %s32, 0
      %p59 = por %p57, %p58
      %s61 = sadd.s32 %s60, 1
      %p64 = scmp.eq.s32.totalorder %s26, 3
      %p65 = scmp.ne.s32.totalorder %s60, %s62
      %p66 = scmp.eq.s32.totalorder %s26, 0
      %p67 = por %p65, %p66
      %p68 = scmp.ne.s32.totalorder %s60, %s62
      %p69 = scmp.eq.s32.totalorder %s31, 3
      %p70 = por %p68, %p69
      %p71 = scmp.ne.s32.totalorder %s62, %s63
      %p72 = scmp.eq.s32.totalorder %s31, 0
      %p73 = por %p71, %p72
      %p74 = scmp.ne.s32.totalorder %s62, %s63
      %p75 = scmp.eq.s32.totalorder %s32, 3
      %p76 = por %p74, %p75
      %p78 = scmp.ne.s32.totalorder %s63, %s77
      %p79 = scmp.eq.s32.totalorder %s32, 0
      %p80 = por %p78, %p79
      %s82 = sadd.s32 %s81, 1
      %p85 = scmp.eq.s32.totalorder %s26, 3
      %p86 = scmp.ne.s32.totalorder %s81, %s83
      %p87 = scmp.eq.s32.totalorder %s26, 0
      %p88 = por %p86, %p87
      %p89 = scmp.ne.s32.totalorder %s81, %s83
      %p90 = scmp.eq.s32.totalorder %s31, 3
      %p91 = por %p89, %p90
      %p92 = scmp.ne.s32.totalorder %s83, %s84
      %p93 = scmp.eq.s32.totalorder %s31, 0
      %p94 = por %p92, %p93
      %p95 = scmp.ne.s32.totalorder %s83, %s84
      %p96 = scmp.eq.s32.totalorder %s32, 3
      %p97 = por %p95, %p96
      %p99 = scmp.ne.s32.totalorder %s84, %s98
      %p100 = scmp.eq.s32.totalorder %s32, 0
      %p101 = por %p99, %p100
      %s103 = sadd.s32 %s102, 1
      %p106 = scmp.eq.s32.totalorder %s26, 3
      %p107 = scmp.ne.s32.totalorder %s102, %s104
      %p108 = scmp.eq.s32.totalorder %s26, 0
      %p109 = por %p107, %p108
      %p110 = scmp.ne.s32.totalorder %s102, %s104
      %p111 = scmp.eq.s32.totalorder %s31, 3
      %p112 = por %p110, %p111
      %p113 = scmp.ne.s32.totalorder %s104, %s105
      %p114 = scmp.eq.s32.totalorder %s31, 0
      %p115 = por %p113, %p114
      %p116 = scmp.ne.s32.totalorder %s104, %s105
      %p117 = scmp.eq.s32.totalorder %s32, 3
      %p118 = por %p116, %p117
      %p120 = scmp.ne.s32.totalorder %s105, %s119
      %p121 = scmp.eq.s32.totalorder %s32, 0
      %p122 = por %p120, %p121
      %s124 = sadd.s32 %s123, 1
      %p127 = scmp.eq.s32.totalorder %s26, 3
      %p128 = scmp.ne.s32.totalorder %s123, %s125
      %p129 = scmp.eq.s32.totalorder %s26, 0
      %p130 = por %p128, %p129
      %p131 = scmp.ne.s32.totalorder %s123, %s125
      %p132 = scmp.eq.s32.totalorder %s31, 3
      %p133 = por %p131, %p132
      %p134 = scmp.ne.s32.totalorder %s125, %s126
      %p135 = scmp.eq.s32.totalorder %s31, 0
      %p136 = por %p134, %p135
      %p137 = scmp.ne.s32.totalorder %s125, %s126
      %p138 = scmp.eq.s32.totalorder %s32, 3
      %p139 = por %p137, %p138
      %p141 = scmp.ne.s32.totalorder %s126, %s140
      %p142 = scmp.eq.s32.totalorder %s32, 0
      %p143 = por %p141, %p142
      %s145 = sadd.s32 %s144, 1
      %p148 = scmp.eq.s32.totalorder %s26, 3
      %p149 = scmp.ne.s32.totalorder %s144, %s146
      %p150 = scmp.eq.s32.totalorder %s26, 0
      %p151 = por %p149, %p150
      %p152 = scmp.ne.s32.totalorder %s144, %s146
      %p153 = scmp.eq.s32.totalorder %s31, 3
      %p154 = por %p152, %p153
      %p155 = scmp.ne.s32.totalorder %s146, %s147
      %p156 = scmp.eq.s32.totalorder %s31, 0
      %p157 = por %p155, %p156
      %p158 = scmp.ne.s32.totalorder %s146, %s147
      %p159 = scmp.eq.s32.totalorder %s32, 3
      %p160 = por %p158, %p159
      %p162 = scmp.ne.s32.totalorder %s147, %s161
      %p163 = scmp.eq.s32.totalorder %s32, 0
      %p164 = por %p162, %p163
      %s166 = sadd.s32 %s165, 1
      %p169 = scmp.eq.s32.totalorder %s26, 3
      %p170 = scmp.ne.s32.totalorder %s165, %s167
      %p171 = scmp.eq.s32.totalorder %s26, 0
      %p172 = por %p170, %p171
      %p173 = scmp.ne.s32.totalorder %s165, %s167
      %p174 = scmp.eq.s32.totalorder %s31, 3
      %p175 = por %p173, %p174
      %p176 = scmp.ne.s32.totalorder %s167, %s168
      %p177 = scmp.eq.s32.totalorder %s31, 0
      %p178 = por %p176, %p177
      %p179 = scmp.ne.s32.totalorder %s167, %s168
      %p180 = scmp.eq.s32.totalorder %s32, 3
      %p181 = por %p179, %p180
      %p183 = scmp.ne.s32.totalorder %s168, %s182
      %p184 = scmp.eq.s32.totalorder %s32, 0
      %p185 = por %p183, %p184
      %s187 = sadd.s32 %s186, 1
      %p190 = scmp.eq.s32.totalorder %s26, 3
      %p191 = scmp.ne.s32.totalorder %s186, %s188
      %p192 = scmp.eq.s32.totalorder %s26, 0
      %p193 = por %p191, %p192
      %p194 = scmp.ne.s32.totalorder %s186, %s188
      %p195 = scmp.eq.s32.totalorder %s31, 3
      %p196 = por %p194, %p195
      %p197 = scmp.ne.s32.totalorder %s188, %s189
      %p198 = scmp.eq.s32.totalorder %s31, 0
      %p199 = por %p197, %p198
      %p200 = scmp.ne.s32.totalorder %s188, %s189
      %p201 = scmp.eq.s32.totalorder %s32, 3
      %p202 = por %p200, %p201
      %p204 = scmp.ne.s32.totalorder %s189, %s203
      %p205 = scmp.eq.s32.totalorder %s32, 0
      %p206 = por %p204, %p205
      %s208 = sadd.s32 %s207, 1
      %p211 = scmp.eq.s32.totalorder %s26, 3
      %p212 = scmp.ne.s32.totalorder %s207, %s209
      %p213 = scmp.eq.s32.totalorder %s26, 0
      %p214 = por %p212, %p213
      %p215 = scmp.ne.s32.totalorder %s207, %s209
      %p216 = scmp.eq.s32.totalorder %s31, 3
      %p217 = por %p215, %p216
      %p218 = scmp.ne.s32.totalorder %s209, %s210
      %p219 = scmp.eq.s32.totalorder %s31, 0
      %p220 = por %p218, %p219
      %p221 = scmp.ne.s32.totalorder %s209, %s210
      %p222 = scmp.eq.s32.totalorder %s32, 3
      %p223 = por %p221, %p222
      %p225 = scmp.ne.s32.totalorder %s210, %s224
      %p226 = scmp.eq.s32.totalorder %s32, 0
      %p227 = por %p225, %p226
      %s229 = sadd.s32 %s228, 1
      %p232 = scmp.eq.s32.totalorder %s26, 3
      %p233 = scmp.ne.s32.totalorder %s228, %s230
      %p234 = scmp.eq.s32.totalorder %s26, 0
      %p235 = por %p233, %p234
      %p236 = scmp.ne.s32.totalorder %s228, %s230
      %p237 = scmp.eq.s32.totalorder %s31, 3
      %p238 = por %p236, %p237
      %p239 = scmp.ne.s32.totalorder %s230, %s231
      %p240 = scmp.eq.s32.totalorder %s31, 0
      %p241 = por %p239, %p240
      %p242 = scmp.ne.s32.totalorder %s230, %s231
      %p243 = scmp.eq.s32.totalorder %s32, 3
      %p244 = por %p242, %p243
      %p246 = scmp.ne.s32.totalorder %s231, %s245
      %p247 = scmp.eq.s32.totalorder %s32, 0
      %p248 = por %p246, %p247
      %s250 = sadd.s32 %s249, 1
      %p253 = scmp.eq.s32.totalorder %s26, 3
      %p254 = scmp.ne.s32.totalorder %s249, %s251
      %p255 = scmp.eq.s32.totalorder %s26, 0
      %p256 = por %p254, %p255
      %p257 = scmp.ne.s32.totalorder %s249, %s251
      %p258 = scmp.eq.s32.totalorder %s31, 3
      %p259 = por %p257, %p258
      %p260 = scmp.ne.s32.totalorder %s251, %s252
      %p261 = scmp.eq.s32.totalorder %s31, 0
      %p262 = por %p260, %p261
      %p263 = scmp.ne.s32.totalorder %s251, %s252
      %p264 = scmp.eq.s32.totalorder %s32, 3
      %p265 = por %p263, %p264
      %p267 = scmp.ne.s32.totalorder %s252, %s266
      %p268 = scmp.eq.s32.totalorder %s32, 0
      %p269 = por %p267, %p268
      %s270 = ssub.s32 %s26, %s33
      %p271 = scmp.eq.s32.totalorder %s270, 0
      %s273 = sadd.s32 %s272, 1
      %s274 = scalar_select %p271, %s272, %s273
      %p277 = pneg %p271
      %p278 = scmp.eq.s32.totalorder %s26, 3
      %p279 = por %p277, %p278
      %p280 = scmp.ne.s32.totalorder %s272, %s275
      %p281 = scmp.eq.s32.totalorder %s26, 0
      %p282 = por %p280, %p281
      %p283 = scmp.ne.s32.totalorder %s272, %s275
      %p284 = scmp.eq.s32.totalorder %s31, 3
      %p285 = por %p283, %p284
      %p286 = scmp.ne.s32.totalorder %s275, %s276
      %p287 = scmp.eq.s32.totalorder %s31, 0
      %p288 = por %p286, %p287
      %p289 = scmp.ne.s32.totalorder %s275, %s276
      %p290 = scmp.eq.s32.totalorder %s32, 3
      %p291 = por %p289, %p290
      %p293 = scmp.ne.s32.totalorder %s276, %s292
      %p294 = scmp.eq.s32.totalorder %s32, 0
      %p295 = por %p293, %p294
      %p296 = scmp.le.s32.totalorder 1, %s26
      %p297 = scmp.lt.s32.totalorder %s26, 5
      %p298 = pnand %p296, %p297
      %p299 = pneg %p298
      // Predicated region
      $region9: #{tpu_custom_call.1} parent=5 // pred_check
        _
      $region10: #{tpu_custom_call.1} parent=5 // pred_check_branch
        %301 = sbr.rel (%p298) target = $region12
      $region11: #{tpu_custom_call.1} parent=5 // pred_region
        %s302 = ssub.s32 %s26, 1
        // Predicated region
        $region13: #{tpu_custom_call.1} parent=11 // pred_check
          %p303 = pneg %p73
        $region14: #{tpu_custom_call.1} parent=11 // pred_check_branch
          %305 = sbr.rel (%p303) target = $region16
        $region15: #{tpu_custom_call.1} parent=11 // pred_region
          %s307 = ssub.s32 1024, 1024
          %308 = vsyncadd [#allocation6], %s307
          %s309 = sshll.u32 [#allocation5], 4
          %s310 = int_to_ptr.vmem [resolvable:$true] %s309
          %315 = dma.hbm_to_vmem [thread:$0]  %s1, 1024, %s310, [#allocation6], 64, 64, 4
        $region16: #{tpu_custom_call.1} parent=11 // pred_fallthru
          _
        // Predicated region
        $region17: #{tpu_custom_call.1} parent=11 // pred_check
          %p316 = pneg %p94
        $region18: #{tpu_custom_call.1} parent=11 // pred_check_branch
          %318 = sbr.rel (%p316) target = $region20
        $region19: #{tpu_custom_call.1} parent=11 // pred_region
          _
        $region20: #{tpu_custom_call.1} parent=11 // pred_fallthru
          _
        // Predicated region
        $region21: #{tpu_custom_call.1} parent=11 // pred_check
          %p319 = pneg %p115
        $region22: #{tpu_custom_call.1} parent=11 // pred_check_branch
          %321 = sbr.rel (%p319) target = $region24
        $region23: #{tpu_custom_call.1} parent=11 // pred_region
          %s323 = ssub.s32 1024, 1024
          %324 = vsyncadd [#allocation6], %s323
          %s325 = sshll.u32 [#allocation7], 4
          %s326 = int_to_ptr.vmem [resolvable:$true] %s325
          %331 = dma.hbm_to_vmem [thread:$0]  %s3, 1024, %s326, [#allocation6], 64, 64, 4
        $region24: #{tpu_custom_call.1} parent=11 // pred_fallthru
          _
        // Predicated region
        $region25: #{tpu_custom_call.1} parent=11 // pred_check
          %p332 = pneg %p136
        $region26: #{tpu_custom_call.1} parent=11 // pred_check_branch
          %334 = sbr.rel (%p332) target = $region28
        $region27: #{tpu_custom_call.1} parent=11 // pred_region
          _
        $region28: #{tpu_custom_call.1} parent=11 // pred_fallthru
          _
        // Predicated region
        $region29: #{tpu_custom_call.1} parent=11 // pred_check
          %p335 = pneg %p157
        $region30: #{tpu_custom_call.1} parent=11 // pred_check_branch
          %337 = sbr.rel (%p335) target = $region32
        $region31: #{tpu_custom_call.1} parent=11 // pred_region
          %s339 = ssub.s32 1024, 1024
          %340 = vsyncadd [#allocation9], %s339
          %s341 = sshll.u32 [#allocation8], 4
          %s342 = int_to_ptr.vmem [resolvable:$true] %s341
          %347 = dma.hbm_to_vmem [thread:$0]  %s5, 1024, %s342, [#allocation9], 64, 64, 4
        $region32: #{tpu_custom_call.1} parent=11 // pred_fallthru
          _
        // Predicated region
        $region33: #{tpu_custom_call.1} parent=11 // pred_check
          %p348 = pneg %p178
        $region34: #{tpu_custom_call.1} parent=11 // pred_check_branch
          %350 = sbr.rel (%p348) target = $region36
        $region35: #{tpu_custom_call.1} parent=11 // pred_region
          _
        $region36: #{tpu_custom_call.1} parent=11 // pred_fallthru
          _
        // Predicated region
        $region37: #{tpu_custom_call.1} parent=11 // pred_check
          %p351 = pneg %p199
        $region38: #{tpu_custom_call.1} parent=11 // pred_check_branch
          %353 = sbr.rel (%p351) target = $region40
        $region39: #{tpu_custom_call.1} parent=11 // pred_region
          %s355 = ssub.s32 1024, 1024
          %356 = vsyncadd [#allocation9], %s355
          %s357 = sshll.u32 [#allocation10], 4
          %s358 = int_to_ptr.vmem [resolvable:$true] %s357
          %363 = dma.hbm_to_vmem [thread:$0]  %s7, 1024, %s358, [#allocation9], 64, 64, 4
        $region40: #{tpu_custom_call.1} parent=11 // pred_fallthru
          _
        // Predicated region
        $region41: #{tpu_custom_call.1} parent=11 // pred_check
          %p364 = pneg %p220
        $region42: #{tpu_custom_call.1} parent=11 // pred_check_branch
          %366 = sbr.rel (%p364) target = $region44
        $region43: #{tpu_custom_call.1} parent=11 // pred_region
          _
        $region44: #{tpu_custom_call.1} parent=11 // pred_fallthru
          _
        // Predicated region
        $region45: #{tpu_custom_call.1} parent=11 // pred_check
          %p367 = pneg %p241
        $region46: #{tpu_custom_call.1} parent=11 // pred_check_branch
          %369 = sbr.rel (%p367) target = $region48
        $region47: #{tpu_custom_call.1} parent=11 // pred_region
          %s371 = ssub.s32 1024, 1024
          %372 = vsyncadd [#allocation12], %s371
          %s373 = sshll.u32 [#allocation11], 4
          %s374 = int_to_ptr.vmem [resolvable:$true] %s373
          %379 = dma.hbm_to_vmem [thread:$0]  %s9, 1024, %s374, [#allocation12], 64, 64, 4
        $region48: #{tpu_custom_call.1} parent=11 // pred_fallthru
          _
        // Predicated region
        $region49: #{tpu_custom_call.1} parent=11 // pred_check
          %p380 = pneg %p262
        $region50: #{tpu_custom_call.1} parent=11 // pred_check_branch
          %382 = sbr.rel (%p380) target = $region52
        $region51: #{tpu_custom_call.1} parent=11 // pred_region
          _
        $region52: #{tpu_custom_call.1} parent=11 // pred_fallthru
          _
      $region12: #{tpu_custom_call.1} parent=5 // pred_fallthru
        _
      %p383 = scmp.lt.s32.totalorder %s26, 4
      // Predicated region
      $region53: #{tpu_custom_call.1} parent=5 // pred_check
        %p384 = pneg %p383
      $region54: #{tpu_custom_call.1} parent=5 // pred_check_branch
        %386 = sbr.rel (%p384) target = $region56
      $region55: #{tpu_custom_call.1} parent=5 // pred_region
        // Predicated region
        $region57: #{tpu_custom_call.1} parent=55 // pred_check
          %p387 = pneg %p46
        $region58: #{tpu_custom_call.1} parent=55 // pred_check_branch
          %389 = sbr.rel (%p387) target = $region60
        $region59: #{tpu_custom_call.1} parent=55 // pred_region
          %s390 = sand.u32 %s36, 1
          %s391 = scalar_lea.sflag [#allocation3], %s390
          %s392 = sand.u32 %s36, 1
          %s393 = smul.addr %s392, 128
          %s394 = scalar_lea.vmem [#allocation2], %s393
          %s395 = smul.u32 16, %s26
          %s397 = ssub.s32 2048, 2048
          %398 = vsyncadd %s391, %s397
          %s399 = smul.addr %s395, 128
          %s400 = scalar_lea.hbm %s0, %s399
          %s401 = sshll.u32 %s394, 4
          %s402 = int_to_ptr.vmem [resolvable:$true] %s401
          %407 = dma.hbm_to_vmem [thread:$0]  %s400, 2048, %s402, %s391, 128, 128, 8
        $region60: #{tpu_custom_call.1} parent=55 // pred_fallthru
          _
      $region56: #{tpu_custom_call.1} parent=5 // pred_fallthru
        _
      %p408 = scmp.le.s32.totalorder 1, %s26
      %p409 = scmp.lt.s32.totalorder %s26, 5
      %p410 = pnand %p408, %p409
      %p411 = pneg %p410
      // Predicated region
      $region61: #{tpu_custom_call.1} parent=5 // pred_check
        _
      $region62: #{tpu_custom_call.1} parent=5 // pred_check_branch
        %413 = sbr.rel (%p410) target = $region64
      $region63: #{tpu_custom_call.1} parent=5 // pred_region
        %s414 = ssub.s32 %s26, 1
        %s415 = sand.u32 %s39, 1
        %s416 = scalar_lea.sflag [#allocation3], %s415
        %s417 = sand.u32 %s39, 1
        %s418 = smul.addr %s417, 128
        %s419 = scalar_lea.vmem [#allocation2], %s418
        // Predicated region
        $region65: #{tpu_custom_call.1} parent=63 // pred_check
          %p420 = pneg %p52
        $region66: #{tpu_custom_call.1} parent=63 // pred_check_branch
          %422 = sbr.rel (%p420) target = $region68
        $region67: #{tpu_custom_call.1} parent=63 // pred_region
          %423 = dma.done %s416, 2048
        $region68: #{tpu_custom_call.1} parent=63 // pred_fallthru
          _
        // Predicated region
        $region69: #{tpu_custom_call.1} parent=63 // pred_check
          %p424 = pneg %p73
        $region70: #{tpu_custom_call.1} parent=63 // pred_check_branch
          %426 = sbr.rel (%p424) target = $region72
        $region71: #{tpu_custom_call.1} parent=63 // pred_region
          %427 = dma.done [#allocation6], 1024
        $region72: #{tpu_custom_call.1} parent=63 // pred_fallthru
          _
        // Predicated region
        $region73: #{tpu_custom_call.1} parent=63 // pred_check
          %p428 = pneg %p115
        $region74: #{tpu_custom_call.1} parent=63 // pred_check_branch
          %430 = sbr.rel (%p428) target = $region76
        $region75: #{tpu_custom_call.1} parent=63 // pred_region
          %431 = dma.done [#allocation6], 1024
        $region76: #{tpu_custom_call.1} parent=63 // pred_fallthru
          _
        // Predicated region
        $region77: #{tpu_custom_call.1} parent=63 // pred_check
          %p432 = pneg %p157
        $region78: #{tpu_custom_call.1} parent=63 // pred_check_branch
          %434 = sbr.rel (%p432) target = $region80
        $region79: #{tpu_custom_call.1} parent=63 // pred_region
          %435 = dma.done [#allocation9], 1024
        $region80: #{tpu_custom_call.1} parent=63 // pred_fallthru
          _
        // Predicated region
        $region81: #{tpu_custom_call.1} parent=63 // pred_check
          %p436 = pneg %p199
        $region82: #{tpu_custom_call.1} parent=63 // pred_check_branch
          %438 = sbr.rel (%p436) target = $region84
        $region83: #{tpu_custom_call.1} parent=63 // pred_region
          %439 = dma.done [#allocation9], 1024
        $region84: #{tpu_custom_call.1} parent=63 // pred_fallthru
          _
        // Predicated region
        $region85: #{tpu_custom_call.1} parent=63 // pred_check
          %p440 = pneg %p241
        $region86: #{tpu_custom_call.1} parent=63 // pred_check_branch
          %442 = sbr.rel (%p440) target = $region88
        $region87: #{tpu_custom_call.1} parent=63 // pred_region
          %443 = dma.done [#allocation12], 1024
        $region88: #{tpu_custom_call.1} parent=63 // pred_fallthru
          _
        %s444 = sand.u32 %s39, 1
        %s445 = scalar_lea.sflag [#allocation3], %s444
        %s446 = sand.u32 %s39, 1
        %s447 = smul.addr %s446, 128
        %s448 = scalar_lea.vmem [#allocation2], %s447
        %p449 = pneg %p52
        %p450 = pneg %p49
        %p451 = pneg %p73
        %p452 = pneg %p70
        %p453 = pneg %p94
        %p454 = pneg %p91
        %p455 = pneg %p115
        %p456 = pneg %p112
        %p457 = pneg %p136
        %p458 = pneg %p133
        %p459 = pneg %p157
        %p460 = pneg %p154
        %p461 = pneg %p178
        %p462 = pneg %p175
        %p463 = pneg %p199
        %p464 = pneg %p196
        %p465 = pneg %p220
        %p466 = pneg %p217
        %p467 = pneg %p241
        %p468 = pneg %p238
        %p469 = pneg %p262
        %p470 = pneg %p259
        %p471 = pneg %p288
        %p472 = pneg %p285
        %s473 = sand.u32 %s275, 1
        %s474 = scalar_lea.sflag [#allocation4], %s473
        %s475 = sand.u32 %s275, 1
        %s476 = smul.addr %s475, 128
        %s477 = scalar_lea.vmem [#allocation13], %s476
        %s478 = smul.u32 16, %s31
        %s479 = smul.u32 16, %s31
        %v481 = vld [vmem:[%s419] sm:$0xff]
        %v482 = vld [vmem:[%s419 + $0x8] sm:$0xff]
        %v483 = vld [vmem:[%s419 + $0x10] sm:$0xff]
        %v484 = vld [vmem:[%s419 + $0x18] sm:$0xff]
        %v485 = vld [vmem:[%s419 + $0x20] sm:$0xff]
        %v486 = vld [vmem:[%s419 + $0x28] sm:$0xff]
        %v487 = vld [vmem:[%s419 + $0x30] sm:$0xff]
        %v488 = vld [vmem:[%s419 + $0x38] sm:$0xff]
        %v489 = vld [vmem:[%s419 + $0x40] sm:$0xff]
        %v490 = vld [vmem:[%s419 + $0x48] sm:$0xff]
        %v491 = vld [vmem:[%s419 + $0x50] sm:$0xff]
        %v492 = vld [vmem:[%s419 + $0x58] sm:$0xff]
        %v493 = vld [vmem:[%s419 + $0x60] sm:$0xff]
        %v494 = vld [vmem:[%s419 + $0x68] sm:$0xff]
        %v495 = vld [vmem:[%s419 + $0x70] sm:$0xff]
        %v496 = vld [vmem:[%s419 + $0x78] sm:$0xff]
        %v497 = vpack.c.bf16 %v482, %v481
        %v498 = vpack.c.bf16 %v484, %v483
        %v499 = vpack.c.bf16 %v486, %v485
        %v500 = vpack.c.bf16 %v488, %v487
        %v501 = vpack.c.bf16 %v490, %v489
        %v502 = vpack.c.bf16 %v492, %v491
        %v503 = vpack.c.bf16 %v494, %v493
        %v504 = vpack.c.bf16 %v496, %v495
        %v505 = vld [vmem:[#allocation5] sm:$0xf]
        %v506 = vld [vmem:[#allocation5 + $0x4] sm:$0xf]
        %v507 = vld [vmem:[#allocation5 + $0x8] sm:$0xf]
        %v508 = vld [vmem:[#allocation5 + $0xc] sm:$0xf]
        %v509 = vld [vmem:[#allocation5 + $0x10] sm:$0xf]
        %v510 = vld [vmem:[#allocation5 + $0x14] sm:$0xf]
        %v511 = vld [vmem:[#allocation5 + $0x18] sm:$0xf]
        %v512 = vld [vmem:[#allocation5 + $0x1c] sm:$0xf]
        %v513 = vld [vmem:[#allocation5 + $0x20] sm:$0xf]
        %v514 = vld [vmem:[#allocation5 + $0x24] sm:$0xf]
        %v515 = vld [vmem:[#allocation5 + $0x28] sm:$0xf]
        %v516 = vld [vmem:[#allocation5 + $0x2c] sm:$0xf]
        %v517 = vld [vmem:[#allocation5 + $0x30] sm:$0xf]
        %v518 = vld [vmem:[#allocation5 + $0x34] sm:$0xf]
        %v519 = vld [vmem:[#allocation5 + $0x38] sm:$0xf]
        %v520 = vld [vmem:[#allocation5 + $0x3c] sm:$0xf]
        %v521 = vld [vmem:[%s2] sm:$0x1]
        %v523 = vlaneseq
        %v524 = vshrl.u32 %v523, 7
        %v525 = vsub.s32 0, %v524
        %v526 = vrot.slane %v521, %v525
        %v544 = vunpack.c.l.b16 %v505
        %v545 = vunpack.c.l.b16 %v506
        %v546 = vunpack.c.l.b16 %v507
        %v547 = vunpack.c.l.b16 %v508
        %v548 = vunpack.c.l.b16 %v509
        %v549 = vunpack.c.l.b16 %v510
        %v550 = vunpack.c.l.b16 %v511
        %v551 = vunpack.c.l.b16 %v512
        %v552 = vunpack.c.l.b16 %v513
        %v553 = vunpack.c.l.b16 %v514
        %v554 = vunpack.c.l.b16 %v515
        %v555 = vunpack.c.l.b16 %v516
        %v556 = vunpack.c.l.b16 %v517
        %v557 = vunpack.c.l.b16 %v518
        %v558 = vunpack.c.l.b16 %v519
        %v559 = vunpack.c.l.b16 %v520
        %v560 = vpack.c.b16 %v545, %v544
        %v561 = vpack.c.b16 %v547, %v546
        %v562 = vpack.c.b16 %v549, %v548
        %v563 = vpack.c.b16 %v551, %v550
        %v564 = vpack.c.b16 %v553, %v552
        %v565 = vpack.c.b16 %v555, %v554
        %v566 = vpack.c.b16 %v557, %v556
        %v567 = vpack.c.b16 %v559, %v558
        %576 = vmatprep.subr.bf16.mxu0 0
        %577 = vmatpush1.bf16.msra.mxu0 %v567
        %578 = vmatprep.subr.bf16.mxu0 0
        %579 = vmatpush1.bf16.msra.mxu0 %v566
        %580 = vmatprep.subr.bf16.mxu0 0
        %581 = vmatpush1.bf16.msra.mxu0 %v565
        %582 = vmatprep.subr.bf16.mxu0 0
        %583 = vmatpush1.bf16.msra.mxu0 %v564
        %584 = vmatprep.subr.bf16.mxu0 0
        %585 = vmatpush1.bf16.msra.mxu0 %v563
        %586 = vmatprep.subr.bf16.mxu0 0
        %587 = vmatpush1.bf16.msra.mxu0 %v562
        %588 = vmatprep.subr.bf16.mxu0 0
        %589 = vmatpush1.bf16.msra.mxu0 %v561
        %590 = vmatprep.subr.bf16.mxu0 0
        %591 = vmatpush1.bf16.msra.mxu0 %v560
        %592 = vmatprep.subr.bf16.mxu0 0
        %593 = vmatpush2.bf16.msra.mxu0 0
        %594 = vmatprep.subr.bf16.mxu0 0
        %595 = vmatpush2.bf16.msra.mxu0 0
        %596 = vmatprep.subr.bf16.mxu0 0
        %597 = vmatpush2.bf16.msra.mxu0 0
        %598 = vmatprep.subr.bf16.mxu0 0
        %599 = vmatpush2.bf16.msra.mxu0 0
        %600 = vmatprep.subr.bf16.mxu0 0
        %601 = vmatpush2.bf16.msra.mxu0 0
        %602 = vmatprep.subr.bf16.mxu0 0
        %603 = vmatpush2.bf16.msra.mxu0 0
        %604 = vmatprep.subr.bf16.mxu0 0
        %605 = vmatpush2.bf16.msra.mxu0 0
        %606 = vmatprep.subr.bf16.mxu0 0
        %607 = vmatpush2.bf16.msra.mxu0 0
        %608 = vmatprep.mubr.bf16.mxu0 0
        %609 = vmatmul.mubr.bf16.gmra.mxu0 %v497
        %v610 = vpop.f32.mrf.mxu0
        %v611 = vadd.f32 %v526, %v610
        %v612 = vpop.f32.mrf.mxu0
        %v613 = vpop.f32.mrf.mxu0
        %v614 = vadd.f32 %v526, %v613
        %v615 = vpop.f32.mrf.mxu0
        %616 = vmatprep.mubr.bf16.mxu0 0
        %617 = vmatmul.mubr.bf16.gmra.mxu0 %v498
        %v618 = vpop.f32.mrf.mxu0
        %v619 = vadd.f32 %v526, %v618
        %v620 = vpop.f32.mrf.mxu0
        %v621 = vpop.f32.mrf.mxu0
        %v622 = vadd.f32 %v526, %v621
        %v623 = vpop.f32.mrf.mxu0
        %624 = vmatprep.mubr.bf16.mxu0 0
        %625 = vmatmul.mubr.bf16.gmra.mxu0 %v499
        %v626 = vpop.f32.mrf.mxu0
        %v627 = vadd.f32 %v526, %v626
        %v628 = vpop.f32.mrf.mxu0
        %v629 = vpop.f32.mrf.mxu0
        %v630 = vadd.f32 %v526, %v629
        %v631 = vpop.f32.mrf.mxu0
        %632 = vmatprep.mubr.bf16.mxu0 0
        %633 = vmatmul.mubr.bf16.gmra.mxu0 %v500
        %v634 = vpop.f32.mrf.mxu0
        %v635 = vadd.f32 %v526, %v634
        %v636 = vpop.f32.mrf.mxu0
        %v637 = vpop.f32.mrf.mxu0
        %v638 = vadd.f32 %v526, %v637
        %v639 = vpop.f32.mrf.mxu0
        %640 = vmatprep.mubr.bf16.mxu0 0
        %641 = vmatmul.mubr.bf16.gmra.mxu0 %v501
        %v642 = vpop.f32.mrf.mxu0
        %v643 = vadd.f32 %v526, %v642
        %v644 = vpop.f32.mrf.mxu0
        %v645 = vpop.f32.mrf.mxu0
        %v646 = vadd.f32 %v526, %v645
        %v647 = vpop.f32.mrf.mxu0
        %648 = vmatprep.mubr.bf16.mxu0 0
        %649 = vmatmul.mubr.bf16.gmra.mxu0 %v502
        %v650 = vpop.f32.mrf.mxu0
        %v651 = vadd.f32 %v526, %v650
        %v652 = vpop.f32.mrf.mxu0
        %v653 = vpop.f32.mrf.mxu0
        %v654 = vadd.f32 %v526, %v653
        %v655 = vpop.f32.mrf.mxu0
        %656 = vmatprep.mubr.bf16.mxu0 0
        %657 = vmatmul.mubr.bf16.gmra.mxu0 %v503
        %v658 = vpop.f32.mrf.mxu0
        %v659 = vadd.f32 %v526, %v658
        %v660 = vpop.f32.mrf.mxu0
        %v661 = vpop.f32.mrf.mxu0
        %v662 = vadd.f32 %v526, %v661
        %v663 = vpop.f32.mrf.mxu0
        %664 = vmatprep.mubr.bf16.mxu0 0
        %665 = vmatmul.mubr.bf16.gmra.mxu0 %v504
        %v666 = vpop.f32.mrf.mxu0
        %v667 = vadd.f32 %v526, %v666
        %v668 = vpop.f32.mrf.mxu0
        %v669 = vpop.f32.mrf.mxu0
        %v670 = vadd.f32 %v526, %v669
        %v671 = vpop.f32.mrf.mxu0
        %672 = vdwg.mxu0
        %v673 = vmul.f32 %v481, %v611
        %v674 = vmul.f32 %v482, %v614
        %v675 = vmul.f32 %v483, %v619
        %v676 = vmul.f32 %v484, %v622
        %v677 = vmul.f32 %v485, %v627
        %v678 = vmul.f32 %v486, %v630
        %v679 = vmul.f32 %v487, %v635
        %v680 = vmul.f32 %v488, %v638
        %v681 = vmul.f32 %v489, %v643
        %v682 = vmul.f32 %v490, %v646
        %v683 = vmul.f32 %v491, %v651
        %v684 = vmul.f32 %v492, %v654
        %v685 = vmul.f32 %v493, %v659
        %v686 = vmul.f32 %v494, %v662
        %v687 = vmul.f32 %v495, %v667
        %v688 = vmul.f32 %v496, %v670
        %v689 = vpack.c.bf16 %v674, %v673
        %v690 = vpack.c.bf16 %v676, %v675
        %v691 = vpack.c.bf16 %v678, %v677
        %v692 = vpack.c.bf16 %v680, %v679
        %v693 = vpack.c.bf16 %v682, %v681
        %v694 = vpack.c.bf16 %v684, %v683
        %v695 = vpack.c.bf16 %v686, %v685
        %v696 = vpack.c.bf16 %v688, %v687
        %v697 = vld [vmem:[#allocation7] sm:$0xf]
        %v698 = vld [vmem:[#allocation7 + $0x4] sm:$0xf]
        %v699 = vld [vmem:[#allocation7 + $0x8] sm:$0xf]
        %v700 = vld [vmem:[#allocation7 + $0xc] sm:$0xf]
        %v701 = vld [vmem:[#allocation7 + $0x10] sm:$0xf]
        %v702 = vld [vmem:[#allocation7 + $0x14] sm:$0xf]
        %v703 = vld [vmem:[#allocation7 + $0x18] sm:$0xf]
        %v704 = vld [vmem:[#allocation7 + $0x1c] sm:$0xf]
        %v705 = vld [vmem:[#allocation7 + $0x20] sm:$0xf]
        %v706 = vld [vmem:[#allocation7 + $0x24] sm:$0xf]
        %v707 = vld [vmem:[#allocation7 + $0x28] sm:$0xf]
        %v708 = vld [vmem:[#allocation7 + $0x2c] sm:$0xf]
        %v709 = vld [vmem:[#allocation7 + $0x30] sm:$0xf]
        %v710 = vld [vmem:[#allocation7 + $0x34] sm:$0xf]
        %v711 = vld [vmem:[#allocation7 + $0x38] sm:$0xf]
        %v712 = vld [vmem:[#allocation7 + $0x3c] sm:$0xf]
        %v713 = vld [vmem:[%s4] sm:$0x1]
        %v715 = vlaneseq
        %v716 = vshrl.u32 %v715, 7
        %v717 = vsub.s32 0, %v716
        %v718 = vrot.slane %v713, %v717
        %v736 = vunpack.c.l.b16 %v697
        %v737 = vunpack.c.l.b16 %v698
        %v738 = vunpack.c.l.b16 %v699
        %v739 = vunpack.c.l.b16 %v700
        %v740 = vunpack.c.l.b16 %v701
        %v741 = vunpack.c.l.b16 %v702
        %v742 = vunpack.c.l.b16 %v703
        %v743 = vunpack.c.l.b16 %v704
        %v744 = vunpack.c.l.b16 %v705
        %v745 = vunpack.c.l.b16 %v706
        %v746 = vunpack.c.l.b16 %v707
        %v747 = vunpack.c.l.b16 %v708
        %v748 = vunpack.c.l.b16 %v709
        %v749 = vunpack.c.l.b16 %v710
        %v750 = vunpack.c.l.b16 %v711
        %v751 = vunpack.c.l.b16 %v712
        %v752 = vpack.c.b16 %v737, %v736
        %v753 = vpack.c.b16 %v739, %v738
        %v754 = vpack.c.b16 %v741, %v740
        %v755 = vpack.c.b16 %v743, %v742
        %v756 = vpack.c.b16 %v745, %v744
        %v757 = vpack.c.b16 %v747, %v746
        %v758 = vpack.c.b16 %v749, %v748
        %v759 = vpack.c.b16 %v751, %v750
        %768 = vmatprep.subr.bf16.mxu0 0
        %769 = vmatpush1.bf16.msra.mxu0 %v759
        %770 = vmatprep.subr.bf16.mxu0 0
        %771 = vmatpush1.bf16.msra.mxu0 %v758
        %772 = vmatprep.subr.bf16.mxu0 0
        %773 = vmatpush1.bf16.msra.mxu0 %v757
        %774 = vmatprep.subr.bf16.mxu0 0
        %775 = vmatpush1.bf16.msra.mxu0 %v756
        %776 = vmatprep.subr.bf16.mxu0 0
        %777 = vmatpush1.bf16.msra.mxu0 %v755
        %778 = vmatprep.subr.bf16.mxu0 0
        %779 = vmatpush1.bf16.msra.mxu0 %v754
        %780 = vmatprep.subr.bf16.mxu0 0
        %781 = vmatpush1.bf16.msra.mxu0 %v753
        %782 = vmatprep.subr.bf16.mxu0 0
        %783 = vmatpush1.bf16.msra.mxu0 %v752
        %784 = vmatprep.subr.bf16.mxu0 0
        %785 = vmatpush2.bf16.msra.mxu0 0
        %786 = vmatprep.subr.bf16.mxu0 0
        %787 = vmatpush2.bf16.msra.mxu0 0
        %788 = vmatprep.subr.bf16.mxu0 0
        %789 = vmatpush2.bf16.msra.mxu0 0
        %790 = vmatprep.subr.bf16.mxu0 0
        %791 = vmatpush2.bf16.msra.mxu0 0
        %792 = vmatprep.subr.bf16.mxu0 0
        %793 = vmatpush2.bf16.msra.mxu0 0
        %794 = vmatprep.subr.bf16.mxu0 0
        %795 = vmatpush2.bf16.msra.mxu0 0
        %796 = vmatprep.subr.bf16.mxu0 0
        %797 = vmatpush2.bf16.msra.mxu0 0
        %798 = vmatprep.subr.bf16.mxu0 0
        %799 = vmatpush2.bf16.msra.mxu0 0
        %800 = vmatprep.mubr.bf16.mxu0 0
        %801 = vmatmul.mubr.bf16.gmra.mxu0 %v689
        %v802 = vpop.f32.mrf.mxu0
        %v803 = vadd.f32 %v718, %v802
        %v804 = vpop.f32.mrf.mxu0
        %v805 = vpop.f32.mrf.mxu0
        %v806 = vadd.f32 %v718, %v805
        %v807 = vpop.f32.mrf.mxu0
        %808 = vmatprep.mubr.bf16.mxu0 0
        %809 = vmatmul.mubr.bf16.gmra.mxu0 %v690
        %v810 = vpop.f32.mrf.mxu0
        %v811 = vadd.f32 %v718, %v810
        %v812 = vpop.f32.mrf.mxu0
        %v813 = vpop.f32.mrf.mxu0
        %v814 = vadd.f32 %v718, %v813
        %v815 = vpop.f32.mrf.mxu0
        %816 = vmatprep.mubr.bf16.mxu0 0
        %817 = vmatmul.mubr.bf16.gmra.mxu0 %v691
        %v818 = vpop.f32.mrf.mxu0
        %v819 = vadd.f32 %v718, %v818
        %v820 = vpop.f32.mrf.mxu0
        %v821 = vpop.f32.mrf.mxu0
        %v822 = vadd.f32 %v718, %v821
        %v823 = vpop.f32.mrf.mxu0
        %824 = vmatprep.mubr.bf16.mxu0 0
        %825 = vmatmul.mubr.bf16.gmra.mxu0 %v692
        %v826 = vpop.f32.mrf.mxu0
        %v827 = vadd.f32 %v718, %v826
        %v828 = vpop.f32.mrf.mxu0
        %v829 = vpop.f32.mrf.mxu0
        %v830 = vadd.f32 %v718, %v829
        %v831 = vpop.f32.mrf.mxu0
        %832 = vmatprep.mubr.bf16.mxu0 0
        %833 = vmatmul.mubr.bf16.gmra.mxu0 %v693
        %v834 = vpop.f32.mrf.mxu0
        %v835 = vadd.f32 %v718, %v834
        %v836 = vpop.f32.mrf.mxu0
        %v837 = vpop.f32.mrf.mxu0
        %v838 = vadd.f32 %v718, %v837
        %v839 = vpop.f32.mrf.mxu0
        %840 = vmatprep.mubr.bf16.mxu0 0
        %841 = vmatmul.mubr.bf16.gmra.mxu0 %v694
        %v842 = vpop.f32.mrf.mxu0
        %v843 = vadd.f32 %v718, %v842
        %v844 = vpop.f32.mrf.mxu0
        %v845 = vpop.f32.mrf.mxu0
        %v846 = vadd.f32 %v718, %v845
        %v847 = vpop.f32.mrf.mxu0
        %848 = vmatprep.mubr.bf16.mxu0 0
        %849 = vmatmul.mubr.bf16.gmra.mxu0 %v695
        %v850 = vpop.f32.mrf.mxu0
        %v851 = vadd.f32 %v718, %v850
        %v852 = vpop.f32.mrf.mxu0
        %v853 = vpop.f32.mrf.mxu0
        %v854 = vadd.f32 %v718, %v853
        %v855 = vpop.f32.mrf.mxu0
        %856 = vmatprep.mubr.bf16.mxu0 0
        %857 = vmatmul.mubr.bf16.gmra.mxu0 %v696
        %v858 = vpop.f32.mrf.mxu0
        %v859 = vadd.f32 %v718, %v858
        %v860 = vpop.f32.mrf.mxu0
        %v861 = vpop.f32.mrf.mxu0
        %v862 = vadd.f32 %v718, %v861
        %v863 = vpop.f32.mrf.mxu0
        %864 = vdwg.mxu0
        %v865 = vmul.f32 %v481, %v803
        %v866 = vmul.f32 %v482, %v806
        %v867 = vmul.f32 %v483, %v811
        %v868 = vmul.f32 %v484, %v814
        %v869 = vmul.f32 %v485, %v819
        %v870 = vmul.f32 %v486, %v822
        %v871 = vmul.f32 %v487, %v827
        %v872 = vmul.f32 %v488, %v830
        %v873 = vmul.f32 %v489, %v835
        %v874 = vmul.f32 %v490, %v838
        %v875 = vmul.f32 %v491, %v843
        %v876 = vmul.f32 %v492, %v846
        %v877 = vmul.f32 %v493, %v851
        %v878 = vmul.f32 %v494, %v854
        %v879 = vmul.f32 %v495, %v859
        %v880 = vmul.f32 %v496, %v862
        %v881 = vpack.c.bf16 %v866, %v865
        %v882 = vpack.c.bf16 %v868, %v867
        %v883 = vpack.c.bf16 %v870, %v869
        %v884 = vpack.c.bf16 %v872, %v871
        %v885 = vpack.c.bf16 %v874, %v873
        %v886 = vpack.c.bf16 %v876, %v875
        %v887 = vpack.c.bf16 %v878, %v877
        %v888 = vpack.c.bf16 %v880, %v879
        %v889 = vld [vmem:[#allocation8] sm:$0xf]
        %v890 = vld [vmem:[#allocation8 + $0x4] sm:$0xf]
        %v891 = vld [vmem:[#allocation8 + $0x8] sm:$0xf]
        %v892 = vld [vmem:[#allocation8 + $0xc] sm:$0xf]
        %v893 = vld [vmem:[#allocation8 + $0x10] sm:$0xf]
        %v894 = vld [vmem:[#allocation8 + $0x14] sm:$0xf]
        %v895 = vld [vmem:[#allocation8 + $0x18] sm:$0xf]
        %v896 = vld [vmem:[#allocation8 + $0x1c] sm:$0xf]
        %v897 = vld [vmem:[#allocation8 + $0x20] sm:$0xf]
        %v898 = vld [vmem:[#allocation8 + $0x24] sm:$0xf]
        %v899 = vld [vmem:[#allocation8 + $0x28] sm:$0xf]
        %v900 = vld [vmem:[#allocation8 + $0x2c] sm:$0xf]
        %v901 = vld [vmem:[#allocation8 + $0x30] sm:$0xf]
        %v902 = vld [vmem:[#allocation8 + $0x34] sm:$0xf]
        %v903 = vld [vmem:[#allocation8 + $0x38] sm:$0xf]
        %v904 = vld [vmem:[#allocation8 + $0x3c] sm:$0xf]
        %v905 = vld [vmem:[%s6] sm:$0x1]
        %v907 = vlaneseq
        %v908 = vshrl.u32 %v907, 7
        %v909 = vsub.s32 0, %v908
        %v910 = vrot.slane %v905, %v909
        %v928 = vunpack.c.l.b16 %v889
        %v929 = vunpack.c.l.b16 %v890
        %v930 = vunpack.c.l.b16 %v891
        %v931 = vunpack.c.l.b16 %v892
        %v932 = vunpack.c.l.b16 %v893
        %v933 = vunpack.c.l.b16 %v894
        %v934 = vunpack.c.l.b16 %v895
        %v935 = vunpack.c.l.b16 %v896
        %v936 = vunpack.c.l.b16 %v897
        %v937 = vunpack.c.l.b16 %v898
        %v938 = vunpack.c.l.b16 %v899
        %v939 = vunpack.c.l.b16 %v900
        %v940 = vunpack.c.l.b16 %v901
        %v941 = vunpack.c.l.b16 %v902
        %v942 = vunpack.c.l.b16 %v903
        %v943 = vunpack.c.l.b16 %v904
        %v944 = vpack.c.b16 %v929, %v928
        %v945 = vpack.c.b16 %v931, %v930
        %v946 = vpack.c.b16 %v933, %v932
        %v947 = vpack.c.b16 %v935, %v934
        %v948 = vpack.c.b16 %v937, %v936
        %v949 = vpack.c.b16 %v939, %v938
        %v950 = vpack.c.b16 %v941, %v940
        %v951 = vpack.c.b16 %v943, %v942
        %960 = vmatprep.subr.bf16.mxu0 0
        %961 = vmatpush1.bf16.msra.mxu0 %v951
        %962 = vmatprep.subr.bf16.mxu0 0
        %963 = vmatpush1.bf16.msra.mxu0 %v950
        %964 = vmatprep.subr.bf16.mxu0 0
        %965 = vmatpush1.bf16.msra.mxu0 %v949
        %966 = vmatprep.subr.bf16.mxu0 0
        %967 = vmatpush1.bf16.msra.mxu0 %v948
        %968 = vmatprep.subr.bf16.mxu0 0
        %969 = vmatpush1.bf16.msra.mxu0 %v947
        %970 = vmatprep.subr.bf16.mxu0 0
        %971 = vmatpush1.bf16.msra.mxu0 %v946
        %972 = vmatprep.subr.bf16.mxu0 0
        %973 = vmatpush1.bf16.msra.mxu0 %v945
        %974 = vmatprep.subr.bf16.mxu0 0
        %975 = vmatpush1.bf16.msra.mxu0 %v944
        %976 = vmatprep.subr.bf16.mxu0 0
        %977 = vmatpush2.bf16.msra.mxu0 0
        %978 = vmatprep.subr.bf16.mxu0 0
        %979 = vmatpush2.bf16.msra.mxu0 0
        %980 = vmatprep.subr.bf16.mxu0 0
        %981 = vmatpush2.bf16.msra.mxu0 0
        %982 = vmatprep.subr.bf16.mxu0 0
        %983 = vmatpush2.bf16.msra.mxu0 0
        %984 = vmatprep.subr.bf16.mxu0 0
        %985 = vmatpush2.bf16.msra.mxu0 0
        %986 = vmatprep.subr.bf16.mxu0 0
        %987 = vmatpush2.bf16.msra.mxu0 0
        %988 = vmatprep.subr.bf16.mxu0 0
        %989 = vmatpush2.bf16.msra.mxu0 0
        %990 = vmatprep.subr.bf16.mxu0 0
        %991 = vmatpush2.bf16.msra.mxu0 0
        %992 = vmatprep.mubr.bf16.mxu0 0
        %993 = vmatmul.mubr.bf16.gmra.mxu0 %v881
        %v994 = vpop.f32.mrf.mxu0
        %v995 = vadd.f32 %v910, %v994
        %v996 = vpop.f32.mrf.mxu0
        %v997 = vpop.f32.mrf.mxu0
        %v998 = vadd.f32 %v910, %v997
        %v999 = vpop.f32.mrf.mxu0
        %1000 = vmatprep.mubr.bf16.mxu0 0
        %1001 = vmatmul.mubr.bf16.gmra.mxu0 %v882
        %v1002 = vpop.f32.mrf.mxu0
        %v1003 = vadd.f32 %v910, %v1002
        %v1004 = vpop.f32.mrf.mxu0
        %v1005 = vpop.f32.mrf.mxu0
        %v1006 = vadd.f32 %v910, %v1005
        %v1007 = vpop.f32.mrf.mxu0
        %1008 = vmatprep.mubr.bf16.mxu0 0
        %1009 = vmatmul.mubr.bf16.gmra.mxu0 %v883
        %v1010 = vpop.f32.mrf.mxu0
        %v1011 = vadd.f32 %v910, %v1010
        %v1012 = vpop.f32.mrf.mxu0
        %v1013 = vpop.f32.mrf.mxu0
        %v1014 = vadd.f32 %v910, %v1013
        %v1015 = vpop.f32.mrf.mxu0
        %1016 = vmatprep.mubr.bf16.mxu0 0
        %1017 = vmatmul.mubr.bf16.gmra.mxu0 %v884
        %v1018 = vpop.f32.mrf.mxu0
        %v1019 = vadd.f32 %v910, %v1018
        %v1020 = vpop.f32.mrf.mxu0
        %v1021 = vpop.f32.mrf.mxu0
        %v1022 = vadd.f32 %v910, %v1021
        %v1023 = vpop.f32.mrf.mxu0
        %1024 = vmatprep.mubr.bf16.mxu0 0
        %1025 = vmatmul.mubr.bf16.gmra.mxu0 %v885
        %v1026 = vpop.f32.mrf.mxu0
        %v1027 = vadd.f32 %v910, %v1026
        %v1028 = vpop.f32.mrf.mxu0
        %v1029 = vpop.f32.mrf.mxu0
        %v1030 = vadd.f32 %v910, %v1029
        %v1031 = vpop.f32.mrf.mxu0
        %1032 = vmatprep.mubr.bf16.mxu0 0
        %1033 = vmatmul.mubr.bf16.gmra.mxu0 %v886
        %v1034 = vpop.f32.mrf.mxu0
        %v1035 = vadd.f32 %v910, %v1034
        %v1036 = vpop.f32.mrf.mxu0
        %v1037 = vpop.f32.mrf.mxu0
        %v1038 = vadd.f32 %v910, %v1037
        %v1039 = vpop.f32.mrf.mxu0
        %1040 = vmatprep.mubr.bf16.mxu0 0
        %1041 = vmatmul.mubr.bf16.gmra.mxu0 %v887
        %v1042 = vpop.f32.mrf.mxu0
        %v1043 = vadd.f32 %v910, %v1042
        %v1044 = vpop.f32.mrf.mxu0
        %v1045 = vpop.f32.mrf.mxu0
        %v1046 = vadd.f32 %v910, %v1045
        %v1047 = vpop.f32.mrf.mxu0
        %1048 = vmatprep.mubr.bf16.mxu0 0
        %1049 = vmatmul.mubr.bf16.gmra.mxu0 %v888
        %v1050 = vpop.f32.mrf.mxu0
        %v1051 = vadd.f32 %v910, %v1050
        %v1052 = vpop.f32.mrf.mxu0
        %v1053 = vpop.f32.mrf.mxu0
        %v1054 = vadd.f32 %v910, %v1053
        %v1055 = vpop.f32.mrf.mxu0
        %1056 = vdwg.mxu0
        %v1057 = vmax.f32 %v995, 0.0
        %v1058 = vmax.f32 %v998, 0.0
        %v1059 = vmax.f32 %v1003, 0.0
        %v1060 = vmax.f32 %v1006, 0.0
        %v1061 = vmax.f32 %v1011, 0.0
        %v1062 = vmax.f32 %v1014, 0.0
        %v1063 = vmax.f32 %v1019, 0.0
        %v1064 = vmax.f32 %v1022, 0.0
        %v1065 = vmax.f32 %v1027, 0.0
        %v1066 = vmax.f32 %v1030, 0.0
        %v1067 = vmax.f32 %v1035, 0.0
        %v1068 = vmax.f32 %v1038, 0.0
        %v1069 = vmax.f32 %v1043, 0.0
        %v1070 = vmax.f32 %v1046, 0.0
        %v1071 = vmax.f32 %v1051, 0.0
        %v1072 = vmax.f32 %v1054, 0.0
        %v1073 = vpack.c.bf16 %v1058, %v1057
        %v1074 = vpack.c.bf16 %v1060, %v1059
        %v1075 = vpack.c.bf16 %v1062, %v1061
        %v1076 = vpack.c.bf16 %v1064, %v1063
        %v1077 = vpack.c.bf16 %v1066, %v1065
        %v1078 = vpack.c.bf16 %v1068, %v1067
        %v1079 = vpack.c.bf16 %v1070, %v1069
        %v1080 = vpack.c.bf16 %v1072, %v1071
        %v1081 = vld [vmem:[#allocation10] sm:$0xf]
        %v1082 = vld [vmem:[#allocation10 + $0x4] sm:$0xf]
        %v1083 = vld [vmem:[#allocation10 + $0x8] sm:$0xf]
        %v1084 = vld [vmem:[#allocation10 + $0xc] sm:$0xf]
        %v1085 = vld [vmem:[#allocation10 + $0x10] sm:$0xf]
        %v1086 = vld [vmem:[#allocation10 + $0x14] sm:$0xf]
        %v1087 = vld [vmem:[#allocation10 + $0x18] sm:$0xf]
        %v1088 = vld [vmem:[#allocation10 + $0x1c] sm:$0xf]
        %v1089 = vld [vmem:[#allocation10 + $0x20] sm:$0xf]
        %v1090 = vld [vmem:[#allocation10 + $0x24] sm:$0xf]
        %v1091 = vld [vmem:[#allocation10 + $0x28] sm:$0xf]
        %v1092 = vld [vmem:[#allocation10 + $0x2c] sm:$0xf]
        %v1093 = vld [vmem:[#allocation10 + $0x30] sm:$0xf]
        %v1094 = vld [vmem:[#allocation10 + $0x34] sm:$0xf]
        %v1095 = vld [vmem:[#allocation10 + $0x38] sm:$0xf]
        %v1096 = vld [vmem:[#allocation10 + $0x3c] sm:$0xf]
        %v1097 = vld [vmem:[%s8] sm:$0x1]
        %v1099 = vlaneseq
        %v1100 = vshrl.u32 %v1099, 7
        %v1101 = vsub.s32 0, %v1100
        %v1102 = vrot.slane %v1097, %v1101
        %v1120 = vunpack.c.l.b16 %v1081
        %v1121 = vunpack.c.l.b16 %v1082
        %v1122 = vunpack.c.l.b16 %v1083
        %v1123 = vunpack.c.l.b16 %v1084
        %v1124 = vunpack.c.l.b16 %v1085
        %v1125 = vunpack.c.l.b16 %v1086
        %v1126 = vunpack.c.l.b16 %v1087
        %v1127 = vunpack.c.l.b16 %v1088
        %v1128 = vunpack.c.l.b16 %v1089
        %v1129 = vunpack.c.l.b16 %v1090
        %v1130 = vunpack.c.l.b16 %v1091
        %v1131 = vunpack.c.l.b16 %v1092
        %v1132 = vunpack.c.l.b16 %v1093
        %v1133 = vunpack.c.l.b16 %v1094
        %v1134 = vunpack.c.l.b16 %v1095
        %v1135 = vunpack.c.l.b16 %v1096
        %v1136 = vpack.c.b16 %v1121, %v1120
        %v1137 = vpack.c.b16 %v1123, %v1122
        %v1138 = vpack.c.b16 %v1125, %v1124
        %v1139 = vpack.c.b16 %v1127, %v1126
        %v1140 = vpack.c.b16 %v1129, %v1128
        %v1141 = vpack.c.b16 %v1131, %v1130
        %v1142 = vpack.c.b16 %v1133, %v1132
        %v1143 = vpack.c.b16 %v1135, %v1134
        %1152 = vmatprep.subr.bf16.mxu0 0
        %1153 = vmatpush1.bf16.msra.mxu0 %v1143
        %1154 = vmatprep.subr.bf16.mxu0 0
        %1155 = vmatpush1.bf16.msra.mxu0 %v1142
        %1156 = vmatprep.subr.bf16.mxu0 0
        %1157 = vmatpush1.bf16.msra.mxu0 %v1141
        %1158 = vmatprep.subr.bf16.mxu0 0
        %1159 = vmatpush1.bf16.msra.mxu0 %v1140
        %1160 = vmatprep.subr.bf16.mxu0 0
        %1161 = vmatpush1.bf16.msra.mxu0 %v1139
        %1162 = vmatprep.subr.bf16.mxu0 0
        %1163 = vmatpush1.bf16.msra.mxu0 %v1138
        %1164 = vmatprep.subr.bf16.mxu0 0
        %1165 = vmatpush1.bf16.msra.mxu0 %v1137
        %1166 = vmatprep.subr.bf16.mxu0 0
        %1167 = vmatpush1.bf16.msra.mxu0 %v1136
        %1168 = vmatprep.subr.bf16.mxu0 0
        %1169 = vmatpush2.bf16.msra.mxu0 0
        %1170 = vmatprep.subr.bf16.mxu0 0
        %1171 = vmatpush2.bf16.msra.mxu0 0
        %1172 = vmatprep.subr.bf16.mxu0 0
        %1173 = vmatpush2.bf16.msra.mxu0 0
        %1174 = vmatprep.subr.bf16.mxu0 0
        %1175 = vmatpush2.bf16.msra.mxu0 0
        %1176 = vmatprep.subr.bf16.mxu0 0
        %1177 = vmatpush2.bf16.msra.mxu0 0
        %1178 = vmatprep.subr.bf16.mxu0 0
        %1179 = vmatpush2.bf16.msra.mxu0 0
        %1180 = vmatprep.subr.bf16.mxu0 0
        %1181 = vmatpush2.bf16.msra.mxu0 0
        %1182 = vmatprep.subr.bf16.mxu0 0
        %1183 = vmatpush2.bf16.msra.mxu0 0
        %1184 = vmatprep.mubr.bf16.mxu0 0
        %1185 = vmatmul.mubr.bf16.gmra.mxu0 %v1073
        %v1186 = vpop.f32.mrf.mxu0
        %v1187 = vadd.f32 %v1102, %v1186
        %v1188 = vpop.f32.mrf.mxu0
        %v1189 = vpop.f32.mrf.mxu0
        %v1190 = vadd.f32 %v1102, %v1189
        %v1191 = vpop.f32.mrf.mxu0
        %1192 = vmatprep.mubr.bf16.mxu0 0
        %1193 = vmatmul.mubr.bf16.gmra.mxu0 %v1074
        %v1194 = vpop.f32.mrf.mxu0
        %v1195 = vadd.f32 %v1102, %v1194
        %v1196 = vpop.f32.mrf.mxu0
        %v1197 = vpop.f32.mrf.mxu0
        %v1198 = vadd.f32 %v1102, %v1197
        %v1199 = vpop.f32.mrf.mxu0
        %1200 = vmatprep.mubr.bf16.mxu0 0
        %1201 = vmatmul.mubr.bf16.gmra.mxu0 %v1075
        %v1202 = vpop.f32.mrf.mxu0
        %v1203 = vadd.f32 %v1102, %v1202
        %v1204 = vpop.f32.mrf.mxu0
        %v1205 = vpop.f32.mrf.mxu0
        %v1206 = vadd.f32 %v1102, %v1205
        %v1207 = vpop.f32.mrf.mxu0
        %1208 = vmatprep.mubr.bf16.mxu0 0
        %1209 = vmatmul.mubr.bf16.gmra.mxu0 %v1076
        %v1210 = vpop.f32.mrf.mxu0
        %v1211 = vadd.f32 %v1102, %v1210
        %v1212 = vpop.f32.mrf.mxu0
        %v1213 = vpop.f32.mrf.mxu0
        %v1214 = vadd.f32 %v1102, %v1213
        %v1215 = vpop.f32.mrf.mxu0
        %1216 = vmatprep.mubr.bf16.mxu0 0
        %1217 = vmatmul.mubr.bf16.gmra.mxu0 %v1077
        %v1218 = vpop.f32.mrf.mxu0
        %v1219 = vadd.f32 %v1102, %v1218
        %v1220 = vpop.f32.mrf.mxu0
        %v1221 = vpop.f32.mrf.mxu0
        %v1222 = vadd.f32 %v1102, %v1221
        %v1223 = vpop.f32.mrf.mxu0
        %1224 = vmatprep.mubr.bf16.mxu0 0
        %1225 = vmatmul.mubr.bf16.gmra.mxu0 %v1078
        %v1226 = vpop.f32.mrf.mxu0
        %v1227 = vadd.f32 %v1102, %v1226
        %v1228 = vpop.f32.mrf.mxu0
        %v1229 = vpop.f32.mrf.mxu0
        %v1230 = vadd.f32 %v1102, %v1229
        %v1231 = vpop.f32.mrf.mxu0
        %1232 = vmatprep.mubr.bf16.mxu0 0
        %1233 = vmatmul.mubr.bf16.gmra.mxu0 %v1079
        %v1234 = vpop.f32.mrf.mxu0
        %v1235 = vadd.f32 %v1102, %v1234
        %v1236 = vpop.f32.mrf.mxu0
        %v1237 = vpop.f32.mrf.mxu0
        %v1238 = vadd.f32 %v1102, %v1237
        %v1239 = vpop.f32.mrf.mxu0
        %1240 = vmatprep.mubr.bf16.mxu0 0
        %1241 = vmatmul.mubr.bf16.gmra.mxu0 %v1080
        %v1242 = vpop.f32.mrf.mxu0
        %v1243 = vadd.f32 %v1102, %v1242
        %v1244 = vpop.f32.mrf.mxu0
        %v1245 = vpop.f32.mrf.mxu0
        %v1246 = vadd.f32 %v1102, %v1245
        %v1247 = vpop.f32.mrf.mxu0
        %1248 = vdwg.mxu0
        %v1249 = vmax.f32 %v1187, 0.0
        %v1250 = vmax.f32 %v1190, 0.0
        %v1251 = vmax.f32 %v1195, 0.0
        %v1252 = vmax.f32 %v1198, 0.0
        %v1253 = vmax.f32 %v1203, 0.0
        %v1254 = vmax.f32 %v1206, 0.0
        %v1255 = vmax.f32 %v1211, 0.0
        %v1256 = vmax.f32 %v1214, 0.0
        %v1257 = vmax.f32 %v1219, 0.0
        %v1258 = vmax.f32 %v1222, 0.0
        %v1259 = vmax.f32 %v1227, 0.0
        %v1260 = vmax.f32 %v1230, 0.0
        %v1261 = vmax.f32 %v1235, 0.0
        %v1262 = vmax.f32 %v1238, 0.0
        %v1263 = vmax.f32 %v1243, 0.0
        %v1264 = vmax.f32 %v1246, 0.0
        %v1265 = vpack.c.bf16 %v1250, %v1249
        %v1266 = vpack.c.bf16 %v1252, %v1251
        %v1267 = vpack.c.bf16 %v1254, %v1253
        %v1268 = vpack.c.bf16 %v1256, %v1255
        %v1269 = vpack.c.bf16 %v1258, %v1257
        %v1270 = vpack.c.bf16 %v1260, %v1259
        %v1271 = vpack.c.bf16 %v1262, %v1261
        %v1272 = vpack.c.bf16 %v1264, %v1263
        %v1273 = vld [vmem:[#allocation11] sm:$0xf]
        %v1274 = vld [vmem:[#allocation11 + $0x4] sm:$0xf]
        %v1275 = vld [vmem:[#allocation11 + $0x8] sm:$0xf]
        %v1276 = vld [vmem:[#allocation11 + $0xc] sm:$0xf]
        %v1277 = vld [vmem:[#allocation11 + $0x10] sm:$0xf]
        %v1278 = vld [vmem:[#allocation11 + $0x14] sm:$0xf]
        %v1279 = vld [vmem:[#allocation11 + $0x18] sm:$0xf]
        %v1280 = vld [vmem:[#allocation11 + $0x1c] sm:$0xf]
        %v1281 = vld [vmem:[#allocation11 + $0x20] sm:$0xf]
        %v1282 = vld [vmem:[#allocation11 + $0x24] sm:$0xf]
        %v1283 = vld [vmem:[#allocation11 + $0x28] sm:$0xf]
        %v1284 = vld [vmem:[#allocation11 + $0x2c] sm:$0xf]
        %v1285 = vld [vmem:[#allocation11 + $0x30] sm:$0xf]
        %v1286 = vld [vmem:[#allocation11 + $0x34] sm:$0xf]
        %v1287 = vld [vmem:[#allocation11 + $0x38] sm:$0xf]
        %v1288 = vld [vmem:[#allocation11 + $0x3c] sm:$0xf]
        %v1289 = vld [vmem:[%s10] sm:$0x1]
        %v1291 = vlaneseq
        %v1292 = vshrl.u32 %v1291, 7
        %v1293 = vsub.s32 0, %v1292
        %v1294 = vrot.slane %v1289, %v1293
        %v1312 = vunpack.c.l.b16 %v1273
        %v1313 = vunpack.c.l.b16 %v1274
        %v1314 = vunpack.c.l.b16 %v1275
        %v1315 = vunpack.c.l.b16 %v1276
        %v1316 = vunpack.c.l.b16 %v1277
        %v1317 = vunpack.c.l.b16 %v1278
        %v1318 = vunpack.c.l.b16 %v1279
        %v1319 = vunpack.c.l.b16 %v1280
        %v1320 = vunpack.c.l.b16 %v1281
        %v1321 = vunpack.c.l.b16 %v1282
        %v1322 = vunpack.c.l.b16 %v1283
        %v1323 = vunpack.c.l.b16 %v1284
        %v1324 = vunpack.c.l.b16 %v1285
        %v1325 = vunpack.c.l.b16 %v1286
        %v1326 = vunpack.c.l.b16 %v1287
        %v1327 = vunpack.c.l.b16 %v1288
        %v1328 = vpack.c.b16 %v1313, %v1312
        %v1329 = vpack.c.b16 %v1315, %v1314
        %v1330 = vpack.c.b16 %v1317, %v1316
        %v1331 = vpack.c.b16 %v1319, %v1318
        %v1332 = vpack.c.b16 %v1321, %v1320
        %v1333 = vpack.c.b16 %v1323, %v1322
        %v1334 = vpack.c.b16 %v1325, %v1324
        %v1335 = vpack.c.b16 %v1327, %v1326
        %1344 = vmatprep.subr.bf16.mxu0 0
        %1345 = vmatpush1.bf16.msra.mxu0 %v1335
        %1346 = vmatprep.subr.bf16.mxu0 0
        %1347 = vmatpush1.bf16.msra.mxu0 %v1334
        %1348 = vmatprep.subr.bf16.mxu0 0
        %1349 = vmatpush1.bf16.msra.mxu0 %v1333
        %1350 = vmatprep.subr.bf16.mxu0 0
        %1351 = vmatpush1.bf16.msra.mxu0 %v1332
        %1352 = vmatprep.subr.bf16.mxu0 0
        %1353 = vmatpush1.bf16.msra.mxu0 %v1331
        %1354 = vmatprep.subr.bf16.mxu0 0
        %1355 = vmatpush1.bf16.msra.mxu0 %v1330
        %1356 = vmatprep.subr.bf16.mxu0 0
        %1357 = vmatpush1.bf16.msra.mxu0 %v1329
        %1358 = vmatprep.subr.bf16.mxu0 0
        %1359 = vmatpush1.bf16.msra.mxu0 %v1328
        %1360 = vmatprep.subr.bf16.mxu0 0
        %1361 = vmatpush2.bf16.msra.mxu0 0
        %1362 = vmatprep.subr.bf16.mxu0 0
        %1363 = vmatpush2.bf16.msra.mxu0 0
        %1364 = vmatprep.subr.bf16.mxu0 0
        %1365 = vmatpush2.bf16.msra.mxu0 0
        %1366 = vmatprep.subr.bf16.mxu0 0
        %1367 = vmatpush2.bf16.msra.mxu0 0
        %1368 = vmatprep.subr.bf16.mxu0 0
        %1369 = vmatpush2.bf16.msra.mxu0 0
        %1370 = vmatprep.subr.bf16.mxu0 0
        %1371 = vmatpush2.bf16.msra.mxu0 0
        %1372 = vmatprep.subr.bf16.mxu0 0
        %1373 = vmatpush2.bf16.msra.mxu0 0
        %1374 = vmatprep.subr.bf16.mxu0 0
        %1375 = vmatpush2.bf16.msra.mxu0 0
        %1376 = vmatprep.mubr.bf16.mxu0 0
        %1377 = vmatmul.mubr.bf16.gmra.mxu0 %v1265
        %v1378 = vpop.f32.mrf.mxu0
        %v1379 = vadd.f32 %v1294, %v1378
        %v1380 = vpop.f32.mrf.mxu0
        %v1381 = vpop.f32.mrf.mxu0
        %v1382 = vadd.f32 %v1294, %v1381
        %v1383 = vpop.f32.mrf.mxu0
        %1384 = vmatprep.mubr.bf16.mxu0 0
        %1385 = vmatmul.mubr.bf16.gmra.mxu0 %v1266
        %v1386 = vpop.f32.mrf.mxu0
        %v1387 = vadd.f32 %v1294, %v1386
        %v1388 = vpop.f32.mrf.mxu0
        %v1389 = vpop.f32.mrf.mxu0
        %v1390 = vadd.f32 %v1294, %v1389
        %v1391 = vpop.f32.mrf.mxu0
        %1392 = vmatprep.mubr.bf16.mxu0 0
        %1393 = vmatmul.mubr.bf16.gmra.mxu0 %v1267
        %v1394 = vpop.f32.mrf.mxu0
        %v1395 = vadd.f32 %v1294, %v1394
        %v1396 = vpop.f32.mrf.mxu0
        %v1397 = vpop.f32.mrf.mxu0
        %v1398 = vadd.f32 %v1294, %v1397
        %v1399 = vpop.f32.mrf.mxu0
        %1400 = vmatprep.mubr.bf16.mxu0 0
        %1401 = vmatmul.mubr.bf16.gmra.mxu0 %v1268
        %v1402 = vpop.f32.mrf.mxu0
        %v1403 = vadd.f32 %v1294, %v1402
        %v1404 = vpop.f32.mrf.mxu0
        %v1405 = vpop.f32.mrf.mxu0
        %v1406 = vadd.f32 %v1294, %v1405
        %v1407 = vpop.f32.mrf.mxu0
        %1408 = vmatprep.mubr.bf16.mxu0 0
        %1409 = vmatmul.mubr.bf16.gmra.mxu0 %v1269
        %v1410 = vpop.f32.mrf.mxu0
        %v1411 = vadd.f32 %v1294, %v1410
        %v1412 = vpop.f32.mrf.mxu0
        %v1413 = vpop.f32.mrf.mxu0
        %v1414 = vadd.f32 %v1294, %v1413
        %v1415 = vpop.f32.mrf.mxu0
        %1416 = vmatprep.mubr.bf16.mxu0 0
        %1417 = vmatmul.mubr.bf16.gmra.mxu0 %v1270
        %v1418 = vpop.f32.mrf.mxu0
        %v1419 = vadd.f32 %v1294, %v1418
        %v1420 = vpop.f32.mrf.mxu0
        %v1421 = vpop.f32.mrf.mxu0
        %v1422 = vadd.f32 %v1294, %v1421
        %v1423 = vpop.f32.mrf.mxu0
        %1424 = vmatprep.mubr.bf16.mxu0 0
        %1425 = vmatmul.mubr.bf16.gmra.mxu0 %v1271
        %v1426 = vpop.f32.mrf.mxu0
        %v1427 = vadd.f32 %v1294, %v1426
        %v1428 = vpop.f32.mrf.mxu0
        %v1429 = vpop.f32.mrf.mxu0
        %v1430 = vadd.f32 %v1294, %v1429
        %v1431 = vpop.f32.mrf.mxu0
        %1432 = vmatprep.mubr.bf16.mxu0 0
        %1433 = vmatmul.mubr.bf16.gmra.mxu0 %v1272
        %v1434 = vpop.f32.mrf.mxu0
        %v1435 = vadd.f32 %v1294, %v1434
        %v1436 = vpop.f32.mrf.mxu0
        %v1437 = vpop.f32.mrf.mxu0
        %v1438 = vadd.f32 %v1294, %v1437
        %v1439 = vpop.f32.mrf.mxu0
        %1440 = vdwg.mxu0
        %1441 = vst [vmem:[%s477] sm:$0xff] %v1379
        %1442 = vst [vmem:[%s477 + $0x8] sm:$0xff] %v1382
        %1443 = vst [vmem:[%s477 + $0x10] sm:$0xff] %v1387
        %1444 = vst [vmem:[%s477 + $0x18] sm:$0xff] %v1390
        %1445 = vst [vmem:[%s477 + $0x20] sm:$0xff] %v1395
        %1446 = vst [vmem:[%s477 + $0x28] sm:$0xff] %v1398
        %1447 = vst [vmem:[%s477 + $0x30] sm:$0xff] %v1403
        %1448 = vst [vmem:[%s477 + $0x38] sm:$0xff] %v1406
        %1449 = vst [vmem:[%s477 + $0x40] sm:$0xff] %v1411
        %1450 = vst [vmem:[%s477 + $0x48] sm:$0xff] %v1414
        %1451 = vst [vmem:[%s477 + $0x50] sm:$0xff] %v1419
        %1452 = vst [vmem:[%s477 + $0x58] sm:$0xff] %v1422
        %1453 = vst [vmem:[%s477 + $0x60] sm:$0xff] %v1427
        %1454 = vst [vmem:[%s477 + $0x68] sm:$0xff] %v1430
        %1455 = vst [vmem:[%s477 + $0x70] sm:$0xff] %v1435
        %1456 = vst [vmem:[%s477 + $0x78] sm:$0xff] %v1438
        %s1457 = sand.u32 %s275, 1
        %s1458 = scalar_lea.sflag [#allocation4], %s1457
        %s1459 = sand.u32 %s275, 1
        %s1460 = smul.addr %s1459, 128
        %s1461 = scalar_lea.vmem [#allocation13], %s1460
        // Predicated region
        $region89: #{tpu_custom_call.1} parent=63 // pred_check
          %p1462 = pneg %p285
        $region90: #{tpu_custom_call.1} parent=63 // pred_check_branch
          %1464 = sbr.rel (%p1462) target = $region92
        $region91: #{tpu_custom_call.1} parent=63 // pred_region
          %s1465 = smul.u32 16, %s31
          %s1467 = ssub.s32 2048, 2048
          %1468 = vsyncadd %s1458, %s1467
          %s1469 = smul.addr %s1465, 128
          %s1470 = scalar_lea.hbm %s11, %s1469
          %s1471 = sshll.u32 %s1461, 4
          %s1472 = int_to_ptr.vmem [resolvable:$true] %s1471
          %1477 = dma.vmem_to_hbm [thread:$0]  %s1472, 2048, %s1470, %s1458, 128, 128, 8
        $region92: #{tpu_custom_call.1} parent=63 // pred_fallthru
          _
      $region64: #{tpu_custom_call.1} parent=5 // pred_fallthru
        _
      %p1478 = scmp.le.s32.totalorder 2, %s26
      // Predicated region
      $region93: #{tpu_custom_call.1} parent=5 // pred_check
        %p1479 = pneg %p1478
      $region94: #{tpu_custom_call.1} parent=5 // pred_check_branch
        %1481 = sbr.rel (%p1479) target = $region96
      $region95: #{tpu_custom_call.1} parent=5 // pred_region
        %s1482 = ssub.s32 %s26, 2
        // Predicated region
        $region97: #{tpu_custom_call.1} parent=95 // pred_check
          %p1483 = pneg %p291
        $region98: #{tpu_custom_call.1} parent=95 // pred_check_branch
          %1485 = sbr.rel (%p1483) target = $region100
        $region99: #{tpu_custom_call.1} parent=95 // pred_region
          %s1486 = sand.u32 %s276, 1
          %s1487 = scalar_lea.sflag [#allocation4], %s1486
          %s1488 = sand.u32 %s276, 1
          %s1489 = smul.addr %s1488, 128
          %s1490 = scalar_lea.vmem [#allocation13], %s1489
          %1491 = dma.done %s1487, 2048
        $region100: #{tpu_custom_call.1} parent=95 // pred_fallthru
          _
      $region96: #{tpu_custom_call.1} parent=5 // pred_fallthru
        _
    $region6: #{tpu_custom_call.1} parent=1 // loop_footer
      %s30 = sadd.s32 1, %s26
    $region7: #{tpu_custom_call.1} parent=1 // loop_footer_branch
      %25 = sbr.rel target = $region3
    $region8: #{tpu_custom_call.1} parent=1 // loop_exit
      _
    %1492 = vsyncpa [#allocation3], 1
    %s1493 = scalar_lea.sflag [#allocation3], 1
    %1494 = vsyncpa %s1493, 1
    %1495 = vsyncpa [#allocation6], 1
    %1496 = vsyncpa [#allocation9], 1
    %1497 = vsyncpa [#allocation12], 1
    %1498 = vsyncpa [#allocation4], 1
    %s1499 = scalar_lea.sflag [#allocation4], 1
    %1500 = vsyncpa %s1499, 1

</llo_original>
